<compile_context>
chip_gen: v5e
topology: v5e:2x2
jax: 0.10.0
libtpu: 0.0.40
codegen_flags: <defaults>
</compile_context>

<pallas_src>
import jax
import jax.numpy as jnp
from jax.experimental import pallas as pl
from jax.experimental.pallas import tpu as pltpu

INPUT_DIM = 1260   # hard-coded in Encoder
DIM = 256          # hard-coded in FCNet
HEAD_PAD = 128     # fused (num_outputs + 1) head padded to one lane-dense slab
LN_EPS = 1e-5      # nn.LayerNorm default


def _round_up(x, m):
    return (x + m - 1) // m * m


def _layernorm(h, gamma, beta):
    # Single-pass: mean and mean-of-squares from independent reductions.
    inv_n = 1.0 / h.shape[-1]
    mu = jnp.sum(h, axis=-1, keepdims=True) * inv_n
    ms = jnp.sum(h * h, axis=-1, keepdims=True) * inv_n
    var = ms - mu * mu
    return (h - mu) * jax.lax.rsqrt(var + LN_EPS) * gamma + beta


def fcnet_kernel(
    x_ref,
    w1_ref, b1_ref, g1_ref, be1_ref,
    w2_ref, b2_ref, g2_ref, be2_ref,
    wh_ref, bh_ref,
    out_ref,
):
    # Obs tile arrives exactly as stored in HBM; cast to the matmul dtype here
    # (no wrapper-side pad/cast copy).  Mosaic masks the K=1260 contraction.
    x = x_ref[...].astype(w1_ref.dtype)

    # Encoder layer 1: Linear -> LayerNorm -> Tanh (f32 accumulation on MXU).
    h = jnp.dot(x, w1_ref[...], preferred_element_type=jnp.float32) + b1_ref[...]
    h = jnp.tanh(_layernorm(h, g1_ref[...], be1_ref[...]))

    # Encoder layer 2: Linear -> LayerNorm -> Tanh.
    h = jnp.dot(h.astype(w2_ref.dtype), w2_ref[...],
                preferred_element_type=jnp.float32) + b2_ref[...]
    feats = jnp.tanh(_layernorm(h, g2_ref[...], be2_ref[...]))

    # Fused policy + value head -> lane-dense (tb, 128) slab: [logits | value | pad].
    out_ref[...] = jnp.dot(feats.astype(wh_ref.dtype), wh_ref[...],
                           preferred_element_type=jnp.float32) + bh_ref[...]


def fcnet_forward(obs_flat, action_mask, params, *, use_bf16=True, batch_tile=512):
    B = obs_flat.shape[0]
    num_outputs = action_mask.shape[1]
    assert num_outputs + 1 <= HEAD_PAD

    cdtype = jnp.bfloat16 if use_bf16 else jnp.float32

    # Batch rows padded only to a sublane multiple (no-op for typical RL batch
    # sizes, tiny copy otherwise); feature dim is left at 1260 (full last dim).
    b_pad = _round_up(B, 8)
    x = obs_flat if b_pad == B else jnp.pad(obs_flat, ((0, b_pad - B), (0, 0)))

    # Batch tile: multiple of 8, <= batch_tile, and prefer >= 2 grid steps so the
    # "parallel" batch axis actually shards across v7x's two TensorCores.
    batch_tile = max(8, (batch_tile // 8) * 8)
    if b_pad <= 8:
        tb = b_pad
    else:
        tb = max(8, min(batch_tile, _round_up(pl.cdiv(b_pad, 2), 8)))
    grid = (pl.cdiv(b_pad, tb),)

    # Weights: bf16 (or f32) for the MXU; biases / LN params stay f32.
    w1 = params["w1"].astype(cdtype)                      # (1260, 256)
    w2 = params["w2"].astype(cdtype)                      # (256, 256)

    # Fused policy + value head, padded to 128 output lanes (one-time, tiny).
    wh = jnp.concatenate([params["wpi"], params["wv"]], axis=1)
    wh = jnp.pad(wh, ((0, 0), (0, HEAD_PAD - (num_outputs + 1)))).astype(cdtype)
    bh = jnp.concatenate([params["bpi"], params["bv"]], axis=1)
    bh = jnp.pad(bh, ((0, 0), (0, HEAD_PAD - (num_outputs + 1)))).astype(jnp.float32)

    inputs = (
        x,
        w1, params["b1"], params["g1"], params["be1"],
        w2, params["b2"], params["g2"], params["be2"],
        wh, bh,
    )

    def const(shape):
        # Weight/bias blocks: full array, same block every grid step (VMEM-resident).
        return pl.BlockSpec(shape, lambda i: (0, 0))

    in_specs = [
        pl.BlockSpec((tb, INPUT_DIM), lambda i: (i, 0)),   # obs tile (pipelined)
        const((INPUT_DIM, DIM)), const((1, DIM)), const((1, DIM)), const((1, DIM)),
        const((DIM, DIM)), const((1, DIM)), const((1, DIM)), const((1, DIM)),
        const((DIM, HEAD_PAD)), const((1, HEAD_PAD)),
    ]
    out_specs = pl.BlockSpec((tb, HEAD_PAD), lambda i: (i, 0))

    # Honest VMEM budget from the actual buffers (obs/out double-buffered,
    # weights worst-case double-buffered) + headroom for intermediates.
    obs_item = jnp.dtype(obs_flat.dtype).itemsize
    w_item = jnp.dtype(cdtype).itemsize
    lanes_in = _round_up(INPUT_DIM, 128)                    # physical lane padding
    weight_bytes = ((lanes_in * DIM + DIM * DIM + DIM * HEAD_PAD) * w_item
                    + 7 * DIM * 4 + HEAD_PAD * 4)
    buf_bytes = (2 * tb * lanes_in * obs_item
                 + 2 * tb * HEAD_PAD * 4
                 + 2 * weight_bytes)
    vmem_limit = min(56 * 1024 * 1024,
                     _round_up(buf_bytes, 1 << 20) + 16 * 1024 * 1024)

    rows = grid[0] * tb
    cost = pl.CostEstimate(
        flops=2 * rows * (INPUT_DIM * DIM + DIM * DIM + DIM * HEAD_PAD),
        transcendentals=rows * (2 * DIM + 2),
        bytes_accessed=rows * INPUT_DIM * obs_item + rows * HEAD_PAD * 4 + weight_bytes,
    )

    out = pl.pallas_call(
        fcnet_kernel,
        out_shape=jax.ShapeDtypeStruct((b_pad, HEAD_PAD), jnp.float32),
        grid=grid,
        in_specs=in_specs,
        out_specs=out_specs,
        compiler_params=pltpu.CompilerParams(
            dimension_semantics=("parallel",),
            vmem_limit_bytes=vmem_limit,
        ),
        cost_estimate=cost,
    )(*inputs)

    # Slice the fused slab and apply the action mask on the tiny logits tensor
    # (cheap XLA where; removes the (B, 128) f32 mask slab from the kernel).
    logits = out[:B, :num_outputs]
    logits = jnp.where(action_mask > 0, logits, -jnp.inf)
    value = out[:B, num_outputs]          # value_function() returns shape (-1,)
    return logits, value


def normc_init(key, out_features, in_features, std=1.0):
    """weight ~ N(0,1), each row scaled so its L2 norm equals `std` (PyTorch layout (out, in))."""
    w = jax.random.normal(key, (out_features, in_features), dtype=jnp.float32)
    w = w * (std / jnp.sqrt(jnp.sum(w * w, axis=1, keepdims=True)))
    return w


def make_params(key, num_outputs):
    k1, k2, k3, k4 = jax.random.split(key, 4)
    # PyTorch Linear weight is (out, in); transpose to (in, out) for x @ W in-kernel.
    w1 = normc_init(k1, DIM, INPUT_DIM, std=1.0).T           # (1260, 256)
    w2 = normc_init(k2, DIM, DIM, std=1.0).T                 # (256, 256)
    wpi = normc_init(k3, num_outputs, DIM, std=0.01).T       # (256, num_outputs)
    wv = normc_init(k4, 1, DIM, std=1.0).T                   # (256, 1)
    return {
        "w1": w1, "b1": jnp.zeros((1, DIM), jnp.float32),
        "g1": jnp.ones((1, DIM), jnp.float32), "be1": jnp.zeros((1, DIM), jnp.float32),
        "w2": w2, "b2": jnp.zeros((1, DIM), jnp.float32),
        "g2": jnp.ones((1, DIM), jnp.float32), "be2": jnp.zeros((1, DIM), jnp.float32),
        "wpi": wpi, "bpi": jnp.zeros((1, num_outputs), jnp.float32),
        "wv": wv, "bv": jnp.zeros((1, 1), jnp.float32),
    }


def reference_forward(obs_flat, action_mask, params, *, use_bf16=False):
    """Pure-JAX reference mirroring the PyTorch forward (same casts as the kernel).

    For the f32 path the reference dots use HIGHEST precision so XLA's default
    bf16 matmul demotion does not skew the comparison against the kernel's
    exact-f32 MXU path.
    """
    cdtype = jnp.bfloat16 if use_bf16 else jnp.float32
    prec = None if use_bf16 else jax.lax.Precision.HIGHEST
    x = obs_flat.astype(cdtype)
    w1 = params["w1"].astype(cdtype)
    w2 = params["w2"].astype(cdtype)
    wpi = params["wpi"].astype(cdtype)
    wv = params["wv"].astype(cdtype)

    h = jnp.dot(x, w1, preferred_element_type=jnp.float32, precision=prec) + params["b1"]
    h = jnp.tanh(_layernorm(h, params["g1"], params["be1"]))
    h = jnp.dot(h.astype(cdtype), w2, preferred_element_type=jnp.float32,
                precision=prec) + params["b2"]
    feats = jnp.tanh(_layernorm(h, params["g2"], params["be2"]))

    logits = jnp.dot(feats.astype(cdtype), wpi, preferred_element_type=jnp.float32,
                     precision=prec) + params["bpi"]
    logits = jnp.where(action_mask > 0, logits, -jnp.inf)
    value = (jnp.dot(feats.astype(cdtype), wv, preferred_element_type=jnp.float32,
                     precision=prec) + params["bv"]).reshape(-1)
    return logits, value


if __name__ == "__main__":
    B = 4
    NUM_OUTPUTS = 8

    key = jax.random.PRNGKey(0)
    k_obs, k_mask, k_params = jax.random.split(key, 3)

    obs_flat = jax.random.normal(k_obs, (B, INPUT_DIM), dtype=jnp.float32)
    action_mask = (jax.random.uniform(k_mask, (B, NUM_OUTPUTS)) > 0.3).astype(jnp.int32)
    # make sure every row has at least one valid action
    action_mask = action_mask.at[:, 0].set(1)

    params = make_params(k_params, NUM_OUTPUTS)
    valid = action_mask > 0

    # bf16 fast path: kernel and reference quantize identically -> tight check.
    # f32 path: loose tolerance accommodates MXU f32-precision implementation
    # differences between Mosaic and the XLA reference.
    for use_bf16, tol in ((True, 5e-3), (False, 2e-2)):
        logits, value = fcnet_forward(obs_flat, action_mask, params, use_bf16=use_bf16)
        jax.block_until_ready((logits, value))

        ref_logits, ref_value = reference_forward(obs_flat, action_mask, params, use_bf16=use_bf16)
        assert logits.shape == (B, NUM_OUTPUTS) and value.shape == (B,)
        # compare only at valid positions (masked entries are -inf in both)
        assert jnp.allclose(jnp.where(valid, logits, 0.0),
                            jnp.where(valid, ref_logits, 0.0), atol=tol, rtol=tol)
        # masked positions must be exactly -inf
        masked_view = jnp.where(valid, -jnp.inf, logits)
        assert bool(jnp.all(jnp.isneginf(masked_view)))
        assert jnp.allclose(value, ref_value, atol=tol, rtol=tol)

    print("KERNEL_OK")
</pallas_src>

<mosaic_0001>
module attributes {stable_mosaic.version = 11 : i64} {
  func.func @fcnet_kernel(%arg0: i32, %arg1: memref<8x1260xf32, #tpu.memory_space<vmem>>, %arg2: memref<1260x256xbf16, #tpu.memory_space<vmem>>, %arg3: memref<1x256xf32, #tpu.memory_space<vmem>>, %arg4: memref<1x256xf32, #tpu.memory_space<vmem>>, %arg5: memref<1x256xf32, #tpu.memory_space<vmem>>, %arg6: memref<256x256xbf16, #tpu.memory_space<vmem>>, %arg7: memref<1x256xf32, #tpu.memory_space<vmem>>, %arg8: memref<1x256xf32, #tpu.memory_space<vmem>>, %arg9: memref<1x256xf32, #tpu.memory_space<vmem>>, %arg10: memref<256x128xbf16, #tpu.memory_space<vmem>>, %arg11: memref<1x128xf32, #tpu.memory_space<vmem>>, %arg12: memref<8x128xf32, #tpu.memory_space<vmem>>) attributes {dimension_semantics = [#tpu.dimension_semantics<parallel>], iteration_bounds = array<i64: 1>, scalar_prefetch = 0 : i64, scratch_operands = 0 : i64, tpu.core_type = #tpu.core_type<tc>, window_params = [{transform_indices = @transform_0, window_bounds = array<i64: 8, 1260>}, {pipeline_mode = #tpu.pipeline_mode<synchronous>, transform_indices = @transform_1, window_bounds = array<i64: 1260, 256>}, {pipeline_mode = #tpu.pipeline_mode<synchronous>, transform_indices = @transform_2, window_bounds = array<i64: 1, 256>}, {pipeline_mode = #tpu.pipeline_mode<synchronous>, transform_indices = @transform_3, window_bounds = array<i64: 1, 256>}, {pipeline_mode = #tpu.pipeline_mode<synchronous>, transform_indices = @transform_4, window_bounds = array<i64: 1, 256>}, {pipeline_mode = #tpu.pipeline_mode<synchronous>, transform_indices = @transform_5, window_bounds = array<i64: 256, 256>}, {pipeline_mode = #tpu.pipeline_mode<synchronous>, transform_indices = @transform_6, window_bounds = array<i64: 1, 256>}, {pipeline_mode = #tpu.pipeline_mode<synchronous>, transform_indices = @transform_7, window_bounds = array<i64: 1, 256>}, {pipeline_mode = #tpu.pipeline_mode<synchronous>, transform_indices = @transform_8, window_bounds = array<i64: 1, 256>}, {pipeline_mode = #tpu.pipeline_mode<synchronous>, transform_indices = @transform_9, window_bounds = array<i64: 256, 128>}, {pipeline_mode = #tpu.pipeline_mode<synchronous>, transform_indices = @transform_10, window_bounds = array<i64: 1, 128>}, {transform_indices = @transform_11, window_bounds = array<i64: 8, 128>}]} {
    %c0 = arith.constant 0 : index
    %c0_0 = arith.constant 0 : index
    %0 = vector.load %arg1[%c0, %c0_0] : memref<8x1260xf32, #tpu.memory_space<vmem>>, vector<8x1260xf32>
    %1 = arith.truncf %0 : vector<8x1260xf32> to vector<8x1260xbf16>
    %c0_1 = arith.constant 0 : index
    %c0_2 = arith.constant 0 : index
    %2 = vector.load %arg2[%c0_1, %c0_2] : memref<1260x256xbf16, #tpu.memory_space<vmem>>, vector<1260x256xbf16>
    %cst = arith.constant dense<0.000000e+00> : vector<8x256xf32>
    %3 = tpu.matmul %1, %2, %cst {dimension_numbers = #tpu.dot_dimension_numbers<[1], [0], [0], [1], [0, 0, 1, 1], [], []>} : vector<8x1260xbf16>, vector<1260x256xbf16>, vector<8x256xf32> -> vector<8x256xf32>
    %c0_3 = arith.constant 0 : index
    %c0_4 = arith.constant 0 : index
    %4 = vector.load %arg3[%c0_3, %c0_4] : memref<1x256xf32, #tpu.memory_space<vmem>>, vector<1x256xf32>
    %5 = vector.broadcast %4 : vector<1x256xf32> to vector<8x256xf32>
    %6 = arith.addf %3, %5 : vector<8x256xf32>
    %c0_5 = arith.constant 0 : index
    %c0_6 = arith.constant 0 : index
    %7 = vector.load %arg4[%c0_5, %c0_6] : memref<1x256xf32, #tpu.memory_space<vmem>>, vector<1x256xf32>
    %c0_7 = arith.constant 0 : index
    %c0_8 = arith.constant 0 : index
    %8 = vector.load %arg5[%c0_7, %c0_8] : memref<1x256xf32, #tpu.memory_space<vmem>>, vector<1x256xf32>
    %cst_9 = arith.constant dense<0.000000e+00> : vector<8xf32>
    %9 = vector.multi_reduction <add>, %6, %cst_9 [1] : vector<8x256xf32> to vector<8xf32>
    %10 = vector.shape_cast %9 : vector<8xf32> to vector<8x1xf32>
    %cst_10 = arith.constant 3.906250e-03 : f32
    %11 = vector.broadcast %cst_10 : f32 to vector<8x1xf32>
    %12 = arith.mulf %10, %11 : vector<8x1xf32>
    %13 = arith.mulf %6, %6 : vector<8x256xf32>
    %cst_11 = arith.constant dense<0.000000e+00> : vector<8xf32>
    %14 = vector.multi_reduction <add>, %13, %cst_11 [1] : vector<8x256xf32> to vector<8xf32>
    %15 = vector.shape_cast %14 : vector<8xf32> to vector<8x1xf32>
    %cst_12 = arith.constant 3.906250e-03 : f32
    %16 = vector.broadcast %cst_12 : f32 to vector<8x1xf32>
    %17 = arith.mulf %15, %16 : vector<8x1xf32>
    %18 = arith.mulf %12, %12 : vector<8x1xf32>
    %19 = arith.subf %17, %18 : vector<8x1xf32>
    %20 = vector.broadcast %12 : vector<8x1xf32> to vector<8x256xf32>
    %21 = arith.subf %6, %20 : vector<8x256xf32>
    %cst_13 = arith.constant 9.99999974E-6 : f32
    %22 = vector.broadcast %cst_13 : f32 to vector<8x1xf32>
    %23 = arith.addf %19, %22 : vector<8x1xf32>
    %24 = math.rsqrt %23 : vector<8x1xf32>
    %25 = vector.broadcast %24 : vector<8x1xf32> to vector<8x256xf32>
    %26 = arith.mulf %21, %25 : vector<8x256xf32>
    %27 = vector.broadcast %7 : vector<1x256xf32> to vector<8x256xf32>
    %28 = arith.mulf %26, %27 : vector<8x256xf32>
    %29 = vector.broadcast %8 : vector<1x256xf32> to vector<8x256xf32>
    %30 = arith.addf %28, %29 : vector<8x256xf32>
    %31 = math.tanh %30 : vector<8x256xf32>
    %32 = arith.truncf %31 : vector<8x256xf32> to vector<8x256xbf16>
    %c0_14 = arith.constant 0 : index
    %c0_15 = arith.constant 0 : index
    %33 = vector.load %arg6[%c0_14, %c0_15] : memref<256x256xbf16, #tpu.memory_space<vmem>>, vector<256x256xbf16>
    %cst_16 = arith.constant dense<0.000000e+00> : vector<8x256xf32>
    %34 = tpu.matmul %32, %33, %cst_16 {dimension_numbers = #tpu.dot_dimension_numbers<[1], [0], [0], [1], [0, 0, 1, 1], [], []>} : vector<8x256xbf16>, vector<256x256xbf16>, vector<8x256xf32> -> vector<8x256xf32>
    %c0_17 = arith.constant 0 : index
    %c0_18 = arith.constant 0 : index
    %35 = vector.load %arg7[%c0_17, %c0_18] : memref<1x256xf32, #tpu.memory_space<vmem>>, vector<1x256xf32>
    %36 = vector.broadcast %35 : vector<1x256xf32> to vector<8x256xf32>
    %37 = arith.addf %34, %36 : vector<8x256xf32>
    %c0_19 = arith.constant 0 : index
    %c0_20 = arith.constant 0 : index
    %38 = vector.load %arg8[%c0_19, %c0_20] : memref<1x256xf32, #tpu.memory_space<vmem>>, vector<1x256xf32>
    %c0_21 = arith.constant 0 : index
    %c0_22 = arith.constant 0 : index
    %39 = vector.load %arg9[%c0_21, %c0_22] : memref<1x256xf32, #tpu.memory_space<vmem>>, vector<1x256xf32>
    %cst_23 = arith.constant dense<0.000000e+00> : vector<8xf32>
    %40 = vector.multi_reduction <add>, %37, %cst_23 [1] : vector<8x256xf32> to vector<8xf32>
    %41 = vector.shape_cast %40 : vector<8xf32> to vector<8x1xf32>
    %cst_24 = arith.constant 3.906250e-03 : f32
    %42 = vector.broadcast %cst_24 : f32 to vector<8x1xf32>
    %43 = arith.mulf %41, %42 : vector<8x1xf32>
    %44 = arith.mulf %37, %37 : vector<8x256xf32>
    %cst_25 = arith.constant dense<0.000000e+00> : vector<8xf32>
    %45 = vector.multi_reduction <add>, %44, %cst_25 [1] : vector<8x256xf32> to vector<8xf32>
    %46 = vector.shape_cast %45 : vector<8xf32> to vector<8x1xf32>
    %cst_26 = arith.constant 3.906250e-03 : f32
    %47 = vector.broadcast %cst_26 : f32 to vector<8x1xf32>
    %48 = arith.mulf %46, %47 : vector<8x1xf32>
    %49 = arith.mulf %43, %43 : vector<8x1xf32>
    %50 = arith.subf %48, %49 : vector<8x1xf32>
    %51 = vector.broadcast %43 : vector<8x1xf32> to vector<8x256xf32>
    %52 = arith.subf %37, %51 : vector<8x256xf32>
    %cst_27 = arith.constant 9.99999974E-6 : f32
    %53 = vector.broadcast %cst_27 : f32 to vector<8x1xf32>
    %54 = arith.addf %50, %53 : vector<8x1xf32>
    %55 = math.rsqrt %54 : vector<8x1xf32>
    %56 = vector.broadcast %55 : vector<8x1xf32> to vector<8x256xf32>
    %57 = arith.mulf %52, %56 : vector<8x256xf32>
    %58 = vector.broadcast %38 : vector<1x256xf32> to vector<8x256xf32>
    %59 = arith.mulf %57, %58 : vector<8x256xf32>
    %60 = vector.broadcast %39 : vector<1x256xf32> to vector<8x256xf32>
    %61 = arith.addf %59, %60 : vector<8x256xf32>
    %62 = math.tanh %61 : vector<8x256xf32>
    %63 = arith.truncf %62 : vector<8x256xf32> to vector<8x256xbf16>
    %c0_28 = arith.constant 0 : index
    %c0_29 = arith.constant 0 : index
    %64 = vector.load %arg10[%c0_28, %c0_29] : memref<256x128xbf16, #tpu.memory_space<vmem>>, vector<256x128xbf16>
    %cst_30 = arith.constant dense<0.000000e+00> : vector<8x128xf32>
    %65 = tpu.matmul %63, %64, %cst_30 {dimension_numbers = #tpu.dot_dimension_numbers<[1], [0], [0], [1], [0, 0, 1, 1], [], []>} : vector<8x256xbf16>, vector<256x128xbf16>, vector<8x128xf32> -> vector<8x128xf32>
    %c0_31 = arith.constant 0 : index
    %c0_32 = arith.constant 0 : index
    %66 = vector.load %arg11[%c0_31, %c0_32] : memref<1x128xf32, #tpu.memory_space<vmem>>, vector<1x128xf32>
    %67 = vector.broadcast %66 : vector<1x128xf32> to vector<8x128xf32>
    %68 = arith.addf %65, %67 : vector<8x128xf32>
    %c0_33 = arith.constant 0 : index
    %c0_34 = arith.constant 0 : index
    %69 = vector.load %arg12[%c0_33, %c0_34] : memref<8x128xf32, #tpu.memory_space<vmem>>, vector<8x128xf32>
    tpu.vector_store %arg12[%c0_33, %c0_34], %68 {strides = array<i32>} : memref<8x128xf32, #tpu.memory_space<vmem>>, vector<8x128xf32>,
    return
  }
  func.func @transform_0(%arg0: i32) -> (i32, i32) {
    %c0_i32 = arith.constant 0 : i32
    %c0_i32_0 = arith.constant 0 : i32
    return %arg0, %c0_i32 : i32, i32
  }
  func.func @transform_1(%arg0: i32) -> (i32, i32) {
    %c0_i32 = arith.constant 0 : i32
    %c0_i32_0 = arith.constant 0 : i32
    %c0_i32_1 = arith.constant 0 : i32
    return %c0_i32, %c0_i32_0 : i32, i32
  }
  func.func @transform_2(%arg0: i32) -> (i32, i32) {
    %c0_i32 = arith.constant 0 : i32
    %c0_i32_0 = arith.constant 0 : i32
    %c0_i32_1 = arith.constant 0 : i32
    return %c0_i32, %c0_i32_0 : i32, i32
  }
  func.func @transform_3(%arg0: i32) -> (i32, i32) {
    %c0_i32 = arith.constant 0 : i32
    %c0_i32_0 = arith.constant 0 : i32
    %c0_i32_1 = arith.constant 0 : i32
    return %c0_i32, %c0_i32_0 : i32, i32
  }
  func.func @transform_4(%arg0: i32) -> (i32, i32) {
    %c0_i32 = arith.constant 0 : i32
    %c0_i32_0 = arith.constant 0 : i32
    %c0_i32_1 = arith.constant 0 : i32
    return %c0_i32, %c0_i32_0 : i32, i32
  }
  func.func @transform_5(%arg0: i32) -> (i32, i32) {
    %c0_i32 = arith.constant 0 : i32
    %c0_i32_0 = arith.constant 0 : i32
    %c0_i32_1 = arith.constant 0 : i32
    return %c0_i32, %c0_i32_0 : i32, i32
  }
  func.func @transform_6(%arg0: i32) -> (i32, i32) {
    %c0_i32 = arith.constant 0 : i32
    %c0_i32_0 = arith.constant 0 : i32
    %c0_i32_1 = arith.constant 0 : i32
    return %c0_i32, %c0_i32_0 : i32, i32
  }
  func.func @transform_7(%arg0: i32) -> (i32, i32) {
    %c0_i32 = arith.constant 0 : i32
    %c0_i32_0 = arith.constant 0 : i32
    %c0_i32_1 = arith.constant 0 : i32
    return %c0_i32, %c0_i32_0 : i32, i32
  }
  func.func @transform_8(%arg0: i32) -> (i32, i32) {
    %c0_i32 = arith.constant 0 : i32
    %c0_i32_0 = arith.constant 0 : i32
    %c0_i32_1 = arith.constant 0 : i32
    return %c0_i32, %c0_i32_0 : i32, i32
  }
  func.func @transform_9(%arg0: i32) -> (i32, i32) {
    %c0_i32 = arith.constant 0 : i32
    %c0_i32_0 = arith.constant 0 : i32
    %c0_i32_1 = arith.constant 0 : i32
    return %c0_i32, %c0_i32_0 : i32, i32
  }
  func.func @transform_10(%arg0: i32) -> (i32, i32) {
    %c0_i32 = arith.constant 0 : i32
    %c0_i32_0 = arith.constant 0 : i32
    %c0_i32_1 = arith.constant 0 : i32
    return %c0_i32, %c0_i32_0 : i32, i32
  }
  func.func @transform_11(%arg0: i32) -> (i32, i32) {
    %c0_i32 = arith.constant 0 : i32
    %c0_i32_0 = arith.constant 0 : i32
    return %arg0, %c0_i32 : i32, i32
  }
}

</mosaic_0001>

<llo_original>
// kernel: tpu_custom_call.1
$region0: #{tpu_custom_call.1}
  #allocation0 [shape = 'u32[]', space=smem, size = 0x4, offset = 0x4, fixed_abs, tag = 'smem constant byte address 0x4 - core index']
  #allocation1 [shape = 'u32[72,128]{1,0:T(1,128)}', space=vmem, size = 0x9000, scoped, tag = 'internal scratch']
  %s0 = inlined_call_operand.hbm [shape: f32[8,1260], index: 0, kind: input, shape index: {}]
  %s1 = inlined_call_operand.hbm [shape: bf16[1260,256], index: 1, kind: input, shape index: {}]
  %s2 = inlined_call_operand.hbm [shape: f32[1,256], index: 2, kind: input, shape index: {}]
  %s3 = inlined_call_operand.vmem [shape: f32[1,256], index: 3, kind: input, shape index: {}]
  %s4 = inlined_call_operand.hbm [shape: f32[1,256], index: 4, kind: input, shape index: {}]
  %s5 = inlined_call_operand.hbm [shape: bf16[256,256], index: 5, kind: input, shape index: {}]
  %s6 = inlined_call_operand.vmem [shape: f32[1,256], index: 6, kind: input, shape index: {}]
  %s7 = inlined_call_operand.vmem [shape: f32[1,256], index: 7, kind: input, shape index: {}]
  %s8 = inlined_call_operand.hbm [shape: f32[1,256], index: 8, kind: input, shape index: {}]
  %s9 = inlined_call_operand.hbm [shape: bf16[256,128], index: 9, kind: input, shape index: {}]
  %s10 = inlined_call_operand.vmem [shape: f32[1,128], index: 10, kind: input, shape index: {}]
  %s11 = inlined_call_operand.hbm [shape: f32[8,128], index: 11, kind: output, shape index: {}]
  %s12 = sld [smem:[#allocation0]]
  $region82: #{tpu_custom_call.1} parent=0
    _
  %s14 = ssub.s32 1, %s12
  %s15 = scalar_select 0, %s14, %s12
  $region1: #{tpu_custom_call.1} parent=0
    #allocation2 [shape = 'u8[40960]{0}', space=vmem, size = 0xa000, scoped, tag = 'input window, operand 0, single buffered']
    #allocation3 [shape = 's32[1]{0}', space=sflag, size = 0x4, scoped, tag = 'scoped memory for tpu_custom_call.1']
    #allocation4 [shape = 's32[1]{0}', space=sflag, size = 0x4, scoped, tag = 'scoped memory for tpu_custom_call.1']
    #allocation5 [shape = 'u8[647168]{0}', space=vmem, size = 0x9e000, scoped, tag = 'input window, operand 1, single buffered']
    #allocation6 [shape = 's32[1]{0}', space=sflag, size = 0x4, scoped, tag = 'scoped memory for tpu_custom_call.1']
    #allocation7 [shape = 'u8[1024]{0}', space=vmem, size = 0x400, scoped, tag = 'input window, operand 2, single buffered']
    #allocation8 [shape = 'u8[1024]{0}', space=vmem, size = 0x400, scoped, tag = 'input window, operand 4, single buffered']
    #allocation9 [shape = 's32[1]{0}', space=sflag, size = 0x4, scoped, tag = 'scoped memory for tpu_custom_call.1']
    #allocation10 [shape = 'u8[131072]{0}', space=vmem, size = 0x20000, scoped, tag = 'input window, operand 5, single buffered']
    #allocation11 [shape = 'u8[1024]{0}', space=vmem, size = 0x400, scoped, tag = 'input window, operand 8, single buffered']
    #allocation12 [shape = 's32[1]{0}', space=sflag, size = 0x4, scoped, tag = 'scoped memory for tpu_custom_call.1']
    #allocation13 [shape = 'u8[65536]{0}', space=vmem, size = 0x10000, scoped, tag = 'input window, operand 9, single buffered']
    #allocation14 [shape = 'u8[4096]{0}', space=vmem, size = 0x1000, scoped, tag = 'output window, operand 0, single buffered']
    %16 = vsyncpa [#allocation3], 0
    %17 = vsyncpa [#allocation6], 0
    %18 = vsyncpa [#allocation9], 0
    %19 = vsyncpa [#allocation12], 0
    %20 = vsyncpa [#allocation4], 0
    // Predicated region
    $region2: #{tpu_custom_call.1} parent=1 // pred_check
      _
    $region3: #{tpu_custom_call.1} parent=1 // pred_check_branch
      %22 = sbr.rel (0) target = $region5
    $region4: #{tpu_custom_call.1} parent=1 // pred_region
      %24 = vsyncadd [#allocation3], 0
      %s26 = sshll.u32 %s0, 4
      %s27 = int_to_ptr.hbm [resolvable:$true] %s26
      %s28 = sshll.u32 [#allocation2], 4
      %s29 = int_to_ptr.vmem [resolvable:$true] %s28
      %31 = dma.hbm_to_vmem [thread:$0]  %s27, 1280, %s29, [#allocation3]
    $region5: #{tpu_custom_call.1} parent=1 // pred_fallthru
      _
    // Predicated region
    $region6: #{tpu_custom_call.1} parent=1 // pred_check
      _
    $region7: #{tpu_custom_call.1} parent=1 // pred_check_branch
      %33 = sbr.rel (0) target = $region9
    $region8: #{tpu_custom_call.1} parent=1 // pred_region
      %35 = vsyncadd [#allocation6], 0
      %s36 = sshll.u32 %s1, 4
      %s37 = int_to_ptr.hbm [resolvable:$true] %s36
      %s38 = sshll.u32 [#allocation5], 4
      %s39 = int_to_ptr.vmem [resolvable:$true] %s38
      %44 = dma.hbm_to_vmem [thread:$0]  %s37, 20224, %s39, [#allocation6], 128, 128, 8
    $region9: #{tpu_custom_call.1} parent=1 // pred_fallthru
      _
    // Predicated region
    $region10: #{tpu_custom_call.1} parent=1 // pred_check
      _
    $region11: #{tpu_custom_call.1} parent=1 // pred_check_branch
      %46 = sbr.rel (0) target = $region13
    $region12: #{tpu_custom_call.1} parent=1 // pred_region
      %48 = vsyncadd [#allocation6], 0
      %s50 = sshll.u32 %s2, 4
      %s51 = int_to_ptr.hbm [resolvable:$true] %s50
      %s52 = sshll.u32 [#allocation7], 4
      %s53 = int_to_ptr.vmem [resolvable:$true] %s52
      %55 = dma.hbm_to_vmem [thread:$0]  %s51, 32, %s53, [#allocation6]
    $region13: #{tpu_custom_call.1} parent=1 // pred_fallthru
      _
    // Predicated region
    $region14: #{tpu_custom_call.1} parent=1 // pred_check
      _
    $region15: #{tpu_custom_call.1} parent=1 // pred_check_branch
      %57 = sbr.rel (0) target = $region17
    $region16: #{tpu_custom_call.1} parent=1 // pred_region
      _
    $region17: #{tpu_custom_call.1} parent=1 // pred_fallthru
      _
    // Predicated region
    $region18: #{tpu_custom_call.1} parent=1 // pred_check
      _
    $region19: #{tpu_custom_call.1} parent=1 // pred_check_branch
      %59 = sbr.rel (0) target = $region21
    $region20: #{tpu_custom_call.1} parent=1 // pred_region
      %61 = vsyncadd [#allocation9], 0
      %s63 = sshll.u32 %s4, 4
      %s64 = int_to_ptr.hbm [resolvable:$true] %s63
      %s65 = sshll.u32 [#allocation8], 4
      %s66 = int_to_ptr.vmem [resolvable:$true] %s65
      %68 = dma.hbm_to_vmem [thread:$0]  %s64, 32, %s66, [#allocation9]
    $region21: #{tpu_custom_call.1} parent=1 // pred_fallthru
      _
    // Predicated region
    $region22: #{tpu_custom_call.1} parent=1 // pred_check
      _
    $region23: #{tpu_custom_call.1} parent=1 // pred_check_branch
      %70 = sbr.rel (0) target = $region25
    $region24: #{tpu_custom_call.1} parent=1 // pred_region
      %72 = vsyncadd [#allocation9], 0
      %s73 = sshll.u32 %s5, 4
      %s74 = int_to_ptr.hbm [resolvable:$true] %s73
      %s75 = sshll.u32 [#allocation10], 4
      %s76 = int_to_ptr.vmem [resolvable:$true] %s75
      %81 = dma.hbm_to_vmem [thread:$0]  %s74, 4096, %s76, [#allocation9], 128, 128, 8
    $region25: #{tpu_custom_call.1} parent=1 // pred_fallthru
      _
    // Predicated region
    $region26: #{tpu_custom_call.1} parent=1 // pred_check
      _
    $region27: #{tpu_custom_call.1} parent=1 // pred_check_branch
      %83 = sbr.rel (0) target = $region29
    $region28: #{tpu_custom_call.1} parent=1 // pred_region
      _
    $region29: #{tpu_custom_call.1} parent=1 // pred_fallthru
      _
    // Predicated region
    $region30: #{tpu_custom_call.1} parent=1 // pred_check
      _
    $region31: #{tpu_custom_call.1} parent=1 // pred_check_branch
      %85 = sbr.rel (0) target = $region33
    $region32: #{tpu_custom_call.1} parent=1 // pred_region
      _
    $region33: #{tpu_custom_call.1} parent=1 // pred_fallthru
      _
    // Predicated region
    $region34: #{tpu_custom_call.1} parent=1 // pred_check
      _
    $region35: #{tpu_custom_call.1} parent=1 // pred_check_branch
      %87 = sbr.rel (0) target = $region37
    $region36: #{tpu_custom_call.1} parent=1 // pred_region
      %89 = vsyncadd [#allocation12], 0
      %s91 = sshll.u32 %s8, 4
      %s92 = int_to_ptr.hbm [resolvable:$true] %s91
      %s93 = sshll.u32 [#allocation11], 4
      %s94 = int_to_ptr.vmem [resolvable:$true] %s93
      %96 = dma.hbm_to_vmem [thread:$0]  %s92, 32, %s94, [#allocation12]
    $region37: #{tpu_custom_call.1} parent=1 // pred_fallthru
      _
    // Predicated region
    $region38: #{tpu_custom_call.1} parent=1 // pred_check
      _
    $region39: #{tpu_custom_call.1} parent=1 // pred_check_branch
      %98 = sbr.rel (0) target = $region41
    $region40: #{tpu_custom_call.1} parent=1 // pred_region
      %100 = vsyncadd [#allocation12], 0
      %s101 = sshll.u32 %s9, 4
      %s102 = int_to_ptr.hbm [resolvable:$true] %s101
      %s103 = sshll.u32 [#allocation13], 4
      %s104 = int_to_ptr.vmem [resolvable:$true] %s103
      %109 = dma.hbm_to_vmem [thread:$0]  %s102, 2048, %s104, [#allocation12], 64, 64, 4
    $region41: #{tpu_custom_call.1} parent=1 // pred_fallthru
      _
    // Predicated region
    $region42: #{tpu_custom_call.1} parent=1 // pred_check
      _
    $region43: #{tpu_custom_call.1} parent=1 // pred_check_branch
      %111 = sbr.rel (0) target = $region45
    $region44: #{tpu_custom_call.1} parent=1 // pred_region
      _
    $region45: #{tpu_custom_call.1} parent=1 // pred_fallthru
      _
    // Predicated region
    $region46: #{tpu_custom_call.1} parent=1 // pred_check
      _
    $region47: #{tpu_custom_call.1} parent=1 // pred_check_branch
      %113 = sbr.rel (0) target = $region49
    $region48: #{tpu_custom_call.1} parent=1 // pred_region
      %115 = dma.done [#allocation3], 1280
    $region49: #{tpu_custom_call.1} parent=1 // pred_fallthru
      _
    // Predicated region
    $region50: #{tpu_custom_call.1} parent=1 // pred_check
      _
    $region51: #{tpu_custom_call.1} parent=1 // pred_check_branch
      %117 = sbr.rel (0) target = $region53
    $region52: #{tpu_custom_call.1} parent=1 // pred_region
      %119 = dma.done [#allocation6], 20224
    $region53: #{tpu_custom_call.1} parent=1 // pred_fallthru
      _
    // Predicated region
    $region54: #{tpu_custom_call.1} parent=1 // pred_check
      _
    $region55: #{tpu_custom_call.1} parent=1 // pred_check_branch
      %121 = sbr.rel (0) target = $region57
    $region56: #{tpu_custom_call.1} parent=1 // pred_region
      %123 = dma.done [#allocation6], 32
    $region57: #{tpu_custom_call.1} parent=1 // pred_fallthru
      _
    // Predicated region
    $region58: #{tpu_custom_call.1} parent=1 // pred_check
      _
    $region59: #{tpu_custom_call.1} parent=1 // pred_check_branch
      %125 = sbr.rel (0) target = $region61
    $region60: #{tpu_custom_call.1} parent=1 // pred_region
      %127 = dma.done [#allocation9], 32
    $region61: #{tpu_custom_call.1} parent=1 // pred_fallthru
      _
    // Predicated region
    $region62: #{tpu_custom_call.1} parent=1 // pred_check
      _
    $region63: #{tpu_custom_call.1} parent=1 // pred_check_branch
      %129 = sbr.rel (0) target = $region65
    $region64: #{tpu_custom_call.1} parent=1 // pred_region
      %131 = dma.done [#allocation9], 4096
    $region65: #{tpu_custom_call.1} parent=1 // pred_fallthru
      _
    // Predicated region
    $region66: #{tpu_custom_call.1} parent=1 // pred_check
      _
    $region67: #{tpu_custom_call.1} parent=1 // pred_check_branch
      %133 = sbr.rel (0) target = $region69
    $region68: #{tpu_custom_call.1} parent=1 // pred_region
      %135 = dma.done [#allocation12], 32
    $region69: #{tpu_custom_call.1} parent=1 // pred_fallthru
      _
    // Predicated region
    $region70: #{tpu_custom_call.1} parent=1 // pred_check
      _
    $region71: #{tpu_custom_call.1} parent=1 // pred_check_branch
      %137 = sbr.rel (0) target = $region73
    $region72: #{tpu_custom_call.1} parent=1 // pred_region
      %139 = dma.done [#allocation12], 2048
    $region73: #{tpu_custom_call.1} parent=1 // pred_fallthru
      _
    %v141 = vld [vmem:[#allocation2] sm:$0xff]
    %v142 = vld [vmem:[#allocation2 + $0x8] sm:$0xff]
    %v143 = vld [vmem:[#allocation2 + $0x10] sm:$0xff]
    %v144 = vld [vmem:[#allocation2 + $0x18] sm:$0xff]
    %v145 = vld [vmem:[#allocation2 + $0x20] sm:$0xff]
    %v146 = vld [vmem:[#allocation2 + $0x28] sm:$0xff]
    %v147 = vld [vmem:[#allocation2 + $0x30] sm:$0xff]
    %v148 = vld [vmem:[#allocation2 + $0x38] sm:$0xff]
    %v149 = vld [vmem:[#allocation2 + $0x40] sm:$0xff]
    %v150 = vld [vmem:[#allocation2 + $0x48] sm:$0xff]
    %v151 = vpack.c.bf16 %v141, %v141
    %v152 = vpack.c.bf16 %v142, %v142
    %v153 = vpack.c.bf16 %v143, %v143
    %v154 = vpack.c.bf16 %v144, %v144
    %v155 = vpack.c.bf16 %v145, %v145
    %v156 = vpack.c.bf16 %v146, %v146
    %v157 = vpack.c.bf16 %v147, %v147
    %v158 = vpack.c.bf16 %v148, %v148
    %v159 = vpack.c.bf16 %v149, %v149
    %v160 = vpack.c.bf16 %v150, %v150
    %v161 = vld [vmem:[#allocation5] sm:$0xff]
    %v162 = vld [vmem:[#allocation5 + $0x8] sm:$0xff]
    %v163 = vld [vmem:[#allocation5 + $0x10] sm:$0xff]
    %v164 = vld [vmem:[#allocation5 + $0x18] sm:$0xff]
    %v165 = vld [vmem:[#allocation5 + $0x20] sm:$0xff]
    %v166 = vld [vmem:[#allocation5 + $0x28] sm:$0xff]
    %v167 = vld [vmem:[#allocation5 + $0x30] sm:$0xff]
    %v168 = vld [vmem:[#allocation5 + $0x38] sm:$0xff]
    %v169 = vld [vmem:[#allocation5 + $0x40] sm:$0xff]
    %v170 = vld [vmem:[#allocation5 + $0x48] sm:$0xff]
    %v171 = vld [vmem:[#allocation5 + $0x50] sm:$0xff]
    %v172 = vld [vmem:[#allocation5 + $0x58] sm:$0xff]
    %v173 = vld [vmem:[#allocation5 + $0x60] sm:$0xff]
    %v174 = vld [vmem:[#allocation5 + $0x68] sm:$0xff]
    %v175 = vld [vmem:[#allocation5 + $0x70] sm:$0xff]
    %v176 = vld [vmem:[#allocation5 + $0x78] sm:$0xff]
    %v177 = vld [vmem:[#allocation5 + $0x80] sm:$0xff]
    %v178 = vld [vmem:[#allocation5 + $0x88] sm:$0xff]
    %v179 = vld [vmem:[#allocation5 + $0x90] sm:$0xff]
    %v180 = vld [vmem:[#allocation5 + $0x98] sm:$0xff]
    %v181 = vld [vmem:[#allocation5 + $0xa0] sm:$0xff]
    %v182 = vld [vmem:[#allocation5 + $0xa8] sm:$0xff]
    %v183 = vld [vmem:[#allocation5 + $0xb0] sm:$0xff]
    %v184 = vld [vmem:[#allocation5 + $0xb8] sm:$0xff]
    %v185 = vld [vmem:[#allocation5 + $0xc0] sm:$0xff]
    %v186 = vld [vmem:[#allocation5 + $0xc8] sm:$0xff]
    %v187 = vld [vmem:[#allocation5 + $0xd0] sm:$0xff]
    %v188 = vld [vmem:[#allocation5 + $0xd8] sm:$0xff]
    %v189 = vld [vmem:[#allocation5 + $0xe0] sm:$0xff]
    %v190 = vld [vmem:[#allocation5 + $0xe8] sm:$0xff]
    %v191 = vld [vmem:[#allocation5 + $0xf0] sm:$0xff]
    %v192 = vld [vmem:[#allocation5 + $0xf8] sm:$0xff]
    %v193 = vld [vmem:[#allocation5 + $0x100] sm:$0xff]
    %v194 = vld [vmem:[#allocation5 + $0x108] sm:$0xff]
    %v195 = vld [vmem:[#allocation5 + $0x110] sm:$0xff]
    %v196 = vld [vmem:[#allocation5 + $0x118] sm:$0xff]
    %v197 = vld [vmem:[#allocation5 + $0x120] sm:$0xff]
    %v198 = vld [vmem:[#allocation5 + $0x128] sm:$0xff]
    %v199 = vld [vmem:[#allocation5 + $0x130] sm:$0xff]
    %v200 = vld [vmem:[#allocation5 + $0x138] sm:$0xff]
    %v201 = vld [vmem:[#allocation5 + $0x140] sm:$0xff]
    %v202 = vld [vmem:[#allocation5 + $0x148] sm:$0xff]
    %v203 = vld [vmem:[#allocation5 + $0x150] sm:$0xff]
    %v204 = vld [vmem:[#allocation5 + $0x158] sm:$0xff]
    %v205 = vld [vmem:[#allocation5 + $0x160] sm:$0xff]
    %v206 = vld [vmem:[#allocation5 + $0x168] sm:$0xff]
    %v207 = vld [vmem:[#allocation5 + $0x170] sm:$0xff]
    %v208 = vld [vmem:[#allocation5 + $0x178] sm:$0xff]
    %v209 = vld [vmem:[#allocation5 + $0x180] sm:$0xff]
    %v210 = vld [vmem:[#allocation5 + $0x188] sm:$0xff]
    %v211 = vld [vmem:[#allocation5 + $0x190] sm:$0xff]
    %v212 = vld [vmem:[#allocation5 + $0x198] sm:$0xff]
    %v213 = vld [vmem:[#allocation5 + $0x1a0] sm:$0xff]
    %v214 = vld [vmem:[#allocation5 + $0x1a8] sm:$0xff]
    %v215 = vld [vmem:[#allocation5 + $0x1b0] sm:$0xff]
    %v216 = vld [vmem:[#allocation5 + $0x1b8] sm:$0xff]
    %v217 = vld [vmem:[#allocation5 + $0x1c0] sm:$0xff]
    %v218 = vld [vmem:[#allocation5 + $0x1c8] sm:$0xff]
    %v219 = vld [vmem:[#allocation5 + $0x1d0] sm:$0xff]
    %v220 = vld [vmem:[#allocation5 + $0x1d8] sm:$0xff]
    %v221 = vld [vmem:[#allocation5 + $0x1e0] sm:$0xff]
    %v222 = vld [vmem:[#allocation5 + $0x1e8] sm:$0xff]
    %v223 = vld [vmem:[#allocation5 + $0x1f0] sm:$0xff]
    %v224 = vld [vmem:[#allocation5 + $0x1f8] sm:$0xff]
    %v225 = vld [vmem:[#allocation5 + $0x200] sm:$0xff]
    %v226 = vld [vmem:[#allocation5 + $0x208] sm:$0xff]
    %v227 = vld [vmem:[#allocation5 + $0x210] sm:$0xff]
    %v228 = vld [vmem:[#allocation5 + $0x218] sm:$0xff]
    %v229 = vld [vmem:[#allocation5 + $0x220] sm:$0xff]
    %v230 = vld [vmem:[#allocation5 + $0x228] sm:$0xff]
    %v231 = vld [vmem:[#allocation5 + $0x230] sm:$0xff]
    %v232 = vld [vmem:[#allocation5 + $0x238] sm:$0xff]
    %v233 = vld [vmem:[#allocation5 + $0x240] sm:$0xff]
    %v234 = vld [vmem:[#allocation5 + $0x248] sm:$0xff]
    %v235 = vld [vmem:[#allocation5 + $0x250] sm:$0xff]
    %v236 = vld [vmem:[#allocation5 + $0x258] sm:$0xff]
    %v237 = vld [vmem:[#allocation5 + $0x260] sm:$0xff]
    %v238 = vld [vmem:[#allocation5 + $0x268] sm:$0xff]
    %v239 = vld [vmem:[#allocation5 + $0x270] sm:$0xff]
    %v240 = vld [vmem:[#allocation5 + $0x278] sm:$0xff]
    %v241 = vld [vmem:[#allocation5 + $0x280] sm:$0xff]
    %v242 = vld [vmem:[#allocation5 + $0x288] sm:$0xff]
    %v243 = vld [vmem:[#allocation5 + $0x290] sm:$0xff]
    %v244 = vld [vmem:[#allocation5 + $0x298] sm:$0xff]
    %v245 = vld [vmem:[#allocation5 + $0x2a0] sm:$0xff]
    %v246 = vld [vmem:[#allocation5 + $0x2a8] sm:$0xff]
    %v247 = vld [vmem:[#allocation5 + $0x2b0] sm:$0xff]
    %v248 = vld [vmem:[#allocation5 + $0x2b8] sm:$0xff]
    %v249 = vld [vmem:[#allocation5 + $0x2c0] sm:$0xff]
    %v250 = vld [vmem:[#allocation5 + $0x2c8] sm:$0xff]
    %v251 = vld [vmem:[#allocation5 + $0x2d0] sm:$0xff]
    %v252 = vld [vmem:[#allocation5 + $0x2d8] sm:$0xff]
    %v253 = vld [vmem:[#allocation5 + $0x2e0] sm:$0xff]
    %v254 = vld [vmem:[#allocation5 + $0x2e8] sm:$0xff]
    %v255 = vld [vmem:[#allocation5 + $0x2f0] sm:$0xff]
    %v256 = vld [vmem:[#allocation5 + $0x2f8] sm:$0xff]
    %v257 = vld [vmem:[#allocation5 + $0x300] sm:$0xff]
    %v258 = vld [vmem:[#allocation5 + $0x308] sm:$0xff]
    %v259 = vld [vmem:[#allocation5 + $0x310] sm:$0xff]
    %v260 = vld [vmem:[#allocation5 + $0x318] sm:$0xff]
    %v261 = vld [vmem:[#allocation5 + $0x320] sm:$0xff]
    %v262 = vld [vmem:[#allocation5 + $0x328] sm:$0xff]
    %v263 = vld [vmem:[#allocation5 + $0x330] sm:$0xff]
    %v264 = vld [vmem:[#allocation5 + $0x338] sm:$0xff]
    %v265 = vld [vmem:[#allocation5 + $0x340] sm:$0xff]
    %v266 = vld [vmem:[#allocation5 + $0x348] sm:$0xff]
    %v267 = vld [vmem:[#allocation5 + $0x350] sm:$0xff]
    %v268 = vld [vmem:[#allocation5 + $0x358] sm:$0xff]
    %v269 = vld [vmem:[#allocation5 + $0x360] sm:$0xff]
    %v270 = vld [vmem:[#allocation5 + $0x368] sm:$0xff]
    %v271 = vld [vmem:[#allocation5 + $0x370] sm:$0xff]
    %v272 = vld [vmem:[#allocation5 + $0x378] sm:$0xff]
    %v273 = vld [vmem:[#allocation5 + $0x380] sm:$0xff]
    %v274 = vld [vmem:[#allocation5 + $0x388] sm:$0xff]
    %v275 = vld [vmem:[#allocation5 + $0x390] sm:$0xff]
    %v276 = vld [vmem:[#allocation5 + $0x398] sm:$0xff]
    %v277 = vld [vmem:[#allocation5 + $0x3a0] sm:$0xff]
    %v278 = vld [vmem:[#allocation5 + $0x3a8] sm:$0xff]
    %v279 = vld [vmem:[#allocation5 + $0x3b0] sm:$0xff]
    %v280 = vld [vmem:[#allocation5 + $0x3b8] sm:$0xff]
    %v281 = vld [vmem:[#allocation5 + $0x3c0] sm:$0xff]
    %v282 = vld [vmem:[#allocation5 + $0x3c8] sm:$0xff]
    %v283 = vld [vmem:[#allocation5 + $0x3d0] sm:$0xff]
    %v284 = vld [vmem:[#allocation5 + $0x3d8] sm:$0xff]
    %v285 = vld [vmem:[#allocation5 + $0x3e0] sm:$0xff]
    %v286 = vld [vmem:[#allocation5 + $0x3e8] sm:$0xff]
    %v287 = vld [vmem:[#allocation5 + $0x3f0] sm:$0xff]
    %v288 = vld [vmem:[#allocation5 + $0x3f8] sm:$0xff]
    %v289 = vld [vmem:[#allocation5 + $0x400] sm:$0xff]
    %v290 = vld [vmem:[#allocation5 + $0x408] sm:$0xff]
    %v291 = vld [vmem:[#allocation5 + $0x410] sm:$0xff]
    %v292 = vld [vmem:[#allocation5 + $0x418] sm:$0xff]
    %v293 = vld [vmem:[#allocation5 + $0x420] sm:$0xff]
    %v294 = vld [vmem:[#allocation5 + $0x428] sm:$0xff]
    %v295 = vld [vmem:[#allocation5 + $0x430] sm:$0xff]
    %v296 = vld [vmem:[#allocation5 + $0x438] sm:$0xff]
    %v297 = vld [vmem:[#allocation5 + $0x440] sm:$0xff]
    %v298 = vld [vmem:[#allocation5 + $0x448] sm:$0xff]
    %v299 = vld [vmem:[#allocation5 + $0x450] sm:$0xff]
    %v300 = vld [vmem:[#allocation5 + $0x458] sm:$0xff]
    %v301 = vld [vmem:[#allocation5 + $0x460] sm:$0xff]
    %v302 = vld [vmem:[#allocation5 + $0x468] sm:$0xff]
    %v303 = vld [vmem:[#allocation5 + $0x470] sm:$0xff]
    %v304 = vld [vmem:[#allocation5 + $0x478] sm:$0xff]
    %v305 = vld [vmem:[#allocation5 + $0x480] sm:$0xff]
    %v306 = vld [vmem:[#allocation5 + $0x488] sm:$0xff]
    %v307 = vld [vmem:[#allocation5 + $0x490] sm:$0xff]
    %v308 = vld [vmem:[#allocation5 + $0x498] sm:$0xff]
    %v309 = vld [vmem:[#allocation5 + $0x4a0] sm:$0xff]
    %v310 = vld [vmem:[#allocation5 + $0x4a8] sm:$0xff]
    %v311 = vld [vmem:[#allocation5 + $0x4b0] sm:$0xff]
    %v312 = vld [vmem:[#allocation5 + $0x4b8] sm:$0xff]
    %v313 = vld [vmem:[#allocation5 + $0x4c0] sm:$0xff]
    %v314 = vld [vmem:[#allocation5 + $0x4c8] sm:$0xff]
    %v315 = vld [vmem:[#allocation5 + $0x4d0] sm:$0xff]
    %v316 = vld [vmem:[#allocation5 + $0x4d8] sm:$0xff]
    %v317 = vld [vmem:[#allocation5 + $0x4e0] sm:$0xff]
    %v318 = vld [vmem:[#allocation5 + $0x4e8] sm:$0x33]
    %v319 = vld [vmem:[#allocation7] sm:$0x3]
    %v321 = vperm.slane %v319, 0
    %v322 = vperm.slane %v319, 1
    %v483 = vunpack.c.l.b16 %v161
    %v484 = vunpack.c.h.b16 %v161
    %v485 = vunpack.c.l.b16 %v162
    %v486 = vunpack.c.h.b16 %v162
    %v487 = vunpack.c.l.b16 %v163
    %v488 = vunpack.c.h.b16 %v163
    %v489 = vunpack.c.l.b16 %v164
    %v490 = vunpack.c.h.b16 %v164
    %v491 = vunpack.c.l.b16 %v165
    %v492 = vunpack.c.h.b16 %v165
    %v493 = vunpack.c.l.b16 %v166
    %v494 = vunpack.c.h.b16 %v166
    %v495 = vunpack.c.l.b16 %v167
    %v496 = vunpack.c.h.b16 %v167
    %v497 = vunpack.c.l.b16 %v168
    %v498 = vunpack.c.h.b16 %v168
    %v499 = vunpack.c.l.b16 %v169
    %v500 = vunpack.c.h.b16 %v169
    %v501 = vunpack.c.l.b16 %v170
    %v502 = vunpack.c.h.b16 %v170
    %v503 = vunpack.c.l.b16 %v171
    %v504 = vunpack.c.h.b16 %v171
    %v505 = vunpack.c.l.b16 %v172
    %v506 = vunpack.c.h.b16 %v172
    %v507 = vunpack.c.l.b16 %v173
    %v508 = vunpack.c.h.b16 %v173
    %v509 = vunpack.c.l.b16 %v174
    %v510 = vunpack.c.h.b16 %v174
    %v511 = vunpack.c.l.b16 %v175
    %v512 = vunpack.c.h.b16 %v175
    %v513 = vunpack.c.l.b16 %v176
    %v514 = vunpack.c.h.b16 %v176
    %v515 = vunpack.c.l.b16 %v177
    %v516 = vunpack.c.h.b16 %v177
    %v517 = vunpack.c.l.b16 %v178
    %v518 = vunpack.c.h.b16 %v178
    %v519 = vunpack.c.l.b16 %v179
    %v520 = vunpack.c.h.b16 %v179
    %v521 = vunpack.c.l.b16 %v180
    %v522 = vunpack.c.h.b16 %v180
    %v523 = vunpack.c.l.b16 %v181
    %v524 = vunpack.c.h.b16 %v181
    %v525 = vunpack.c.l.b16 %v182
    %v526 = vunpack.c.h.b16 %v182
    %v527 = vunpack.c.l.b16 %v183
    %v528 = vunpack.c.h.b16 %v183
    %v529 = vunpack.c.l.b16 %v184
    %v530 = vunpack.c.h.b16 %v184
    %v531 = vunpack.c.l.b16 %v185
    %v532 = vunpack.c.h.b16 %v185
    %v533 = vunpack.c.l.b16 %v186
    %v534 = vunpack.c.h.b16 %v186
    %v535 = vunpack.c.l.b16 %v187
    %v536 = vunpack.c.h.b16 %v187
    %v537 = vunpack.c.l.b16 %v188
    %v538 = vunpack.c.h.b16 %v188
    %v539 = vunpack.c.l.b16 %v189
    %v540 = vunpack.c.h.b16 %v189
    %v541 = vunpack.c.l.b16 %v190
    %v542 = vunpack.c.h.b16 %v190
    %v543 = vunpack.c.l.b16 %v191
    %v544 = vunpack.c.h.b16 %v191
    %v545 = vunpack.c.l.b16 %v192
    %v546 = vunpack.c.h.b16 %v192
    %v547 = vunpack.c.l.b16 %v193
    %v548 = vunpack.c.h.b16 %v193
    %v549 = vunpack.c.l.b16 %v194
    %v550 = vunpack.c.h.b16 %v194
    %v551 = vunpack.c.l.b16 %v195
    %v552 = vunpack.c.h.b16 %v195
    %v553 = vunpack.c.l.b16 %v196
    %v554 = vunpack.c.h.b16 %v196
    %v555 = vunpack.c.l.b16 %v197
    %v556 = vunpack.c.h.b16 %v197
    %v557 = vunpack.c.l.b16 %v198
    %v558 = vunpack.c.h.b16 %v198
    %v559 = vunpack.c.l.b16 %v199
    %v560 = vunpack.c.h.b16 %v199
    %v561 = vunpack.c.l.b16 %v200
    %v562 = vunpack.c.h.b16 %v200
    %v563 = vunpack.c.l.b16 %v201
    %v564 = vunpack.c.h.b16 %v201
    %v565 = vunpack.c.l.b16 %v202
    %v566 = vunpack.c.h.b16 %v202
    %v567 = vunpack.c.l.b16 %v203
    %v568 = vunpack.c.h.b16 %v203
    %v569 = vunpack.c.l.b16 %v204
    %v570 = vunpack.c.h.b16 %v204
    %v571 = vunpack.c.l.b16 %v205
    %v572 = vunpack.c.h.b16 %v205
    %v573 = vunpack.c.l.b16 %v206
    %v574 = vunpack.c.h.b16 %v206
    %v575 = vunpack.c.l.b16 %v207
    %v576 = vunpack.c.h.b16 %v207
    %v577 = vunpack.c.l.b16 %v208
    %v578 = vunpack.c.h.b16 %v208
    %v579 = vunpack.c.l.b16 %v209
    %v580 = vunpack.c.h.b16 %v209
    %v581 = vunpack.c.l.b16 %v210
    %v582 = vunpack.c.h.b16 %v210
    %v583 = vunpack.c.l.b16 %v211
    %v584 = vunpack.c.h.b16 %v211
    %v585 = vunpack.c.l.b16 %v212
    %v586 = vunpack.c.h.b16 %v212
    %v587 = vunpack.c.l.b16 %v213
    %v588 = vunpack.c.h.b16 %v213
    %v589 = vunpack.c.l.b16 %v214
    %v590 = vunpack.c.h.b16 %v214
    %v591 = vunpack.c.l.b16 %v215
    %v592 = vunpack.c.h.b16 %v215
    %v593 = vunpack.c.l.b16 %v216
    %v594 = vunpack.c.h.b16 %v216
    %v595 = vunpack.c.l.b16 %v217
    %v596 = vunpack.c.h.b16 %v217
    %v597 = vunpack.c.l.b16 %v218
    %v598 = vunpack.c.h.b16 %v218
    %v599 = vunpack.c.l.b16 %v219
    %v600 = vunpack.c.h.b16 %v219
    %v601 = vunpack.c.l.b16 %v220
    %v602 = vunpack.c.h.b16 %v220
    %v603 = vunpack.c.l.b16 %v221
    %v604 = vunpack.c.h.b16 %v221
    %v605 = vunpack.c.l.b16 %v222
    %v606 = vunpack.c.h.b16 %v222
    %v607 = vunpack.c.l.b16 %v223
    %v608 = vunpack.c.h.b16 %v223
    %v609 = vunpack.c.l.b16 %v224
    %v610 = vunpack.c.h.b16 %v224
    %v611 = vunpack.c.l.b16 %v225
    %v612 = vunpack.c.h.b16 %v225
    %v613 = vunpack.c.l.b16 %v226
    %v614 = vunpack.c.h.b16 %v226
    %v615 = vunpack.c.l.b16 %v227
    %v616 = vunpack.c.h.b16 %v227
    %v617 = vunpack.c.l.b16 %v228
    %v618 = vunpack.c.h.b16 %v228
    %v619 = vunpack.c.l.b16 %v229
    %v620 = vunpack.c.h.b16 %v229
    %v621 = vunpack.c.l.b16 %v230
    %v622 = vunpack.c.h.b16 %v230
    %v623 = vunpack.c.l.b16 %v231
    %v624 = vunpack.c.h.b16 %v231
    %v625 = vunpack.c.l.b16 %v232
    %v626 = vunpack.c.h.b16 %v232
    %v627 = vunpack.c.l.b16 %v233
    %v628 = vunpack.c.h.b16 %v233
    %v629 = vunpack.c.l.b16 %v234
    %v630 = vunpack.c.h.b16 %v234
    %v631 = vunpack.c.l.b16 %v235
    %v632 = vunpack.c.h.b16 %v235
    %v633 = vunpack.c.l.b16 %v236
    %v634 = vunpack.c.h.b16 %v236
    %v635 = vunpack.c.l.b16 %v237
    %v636 = vunpack.c.h.b16 %v237
    %v637 = vunpack.c.l.b16 %v238
    %v638 = vunpack.c.h.b16 %v238
    %v639 = vunpack.c.l.b16 %v239
    %v640 = vunpack.c.h.b16 %v239
    %v641 = vunpack.c.l.b16 %v240
    %v642 = vunpack.c.h.b16 %v240
    %v643 = vunpack.c.l.b16 %v241
    %v644 = vunpack.c.h.b16 %v241
    %v645 = vunpack.c.l.b16 %v242
    %v646 = vunpack.c.h.b16 %v242
    %v647 = vunpack.c.l.b16 %v243
    %v648 = vunpack.c.h.b16 %v243
    %v649 = vunpack.c.l.b16 %v244
    %v650 = vunpack.c.h.b16 %v244
    %v651 = vunpack.c.l.b16 %v245
    %v652 = vunpack.c.h.b16 %v245
    %v653 = vunpack.c.l.b16 %v246
    %v654 = vunpack.c.h.b16 %v246
    %v655 = vunpack.c.l.b16 %v247
    %v656 = vunpack.c.h.b16 %v247
    %v657 = vunpack.c.l.b16 %v248
    %v658 = vunpack.c.h.b16 %v248
    %v659 = vunpack.c.l.b16 %v249
    %v660 = vunpack.c.h.b16 %v249
    %v661 = vunpack.c.l.b16 %v250
    %v662 = vunpack.c.h.b16 %v250
    %v663 = vunpack.c.l.b16 %v251
    %v664 = vunpack.c.h.b16 %v251
    %v665 = vunpack.c.l.b16 %v252
    %v666 = vunpack.c.h.b16 %v252
    %v667 = vunpack.c.l.b16 %v253
    %v668 = vunpack.c.h.b16 %v253
    %v669 = vunpack.c.l.b16 %v254
    %v670 = vunpack.c.h.b16 %v254
    %v671 = vunpack.c.l.b16 %v255
    %v672 = vunpack.c.h.b16 %v255
    %v673 = vunpack.c.l.b16 %v256
    %v674 = vunpack.c.h.b16 %v256
    %v675 = vunpack.c.l.b16 %v257
    %v676 = vunpack.c.h.b16 %v257
    %v677 = vunpack.c.l.b16 %v258
    %v678 = vunpack.c.h.b16 %v258
    %v679 = vunpack.c.l.b16 %v259
    %v680 = vunpack.c.h.b16 %v259
    %v681 = vunpack.c.l.b16 %v260
    %v682 = vunpack.c.h.b16 %v260
    %v683 = vunpack.c.l.b16 %v261
    %v684 = vunpack.c.h.b16 %v261
    %v685 = vunpack.c.l.b16 %v262
    %v686 = vunpack.c.h.b16 %v262
    %v687 = vunpack.c.l.b16 %v263
    %v688 = vunpack.c.h.b16 %v263
    %v689 = vunpack.c.l.b16 %v264
    %v690 = vunpack.c.h.b16 %v264
    %v691 = vunpack.c.l.b16 %v265
    %v692 = vunpack.c.h.b16 %v265
    %v693 = vunpack.c.l.b16 %v266
    %v694 = vunpack.c.h.b16 %v266
    %v695 = vunpack.c.l.b16 %v267
    %v696 = vunpack.c.h.b16 %v267
    %v697 = vunpack.c.l.b16 %v268
    %v698 = vunpack.c.h.b16 %v268
    %v699 = vunpack.c.l.b16 %v269
    %v700 = vunpack.c.h.b16 %v269
    %v701 = vunpack.c.l.b16 %v270
    %v702 = vunpack.c.h.b16 %v270
    %v703 = vunpack.c.l.b16 %v271
    %v704 = vunpack.c.h.b16 %v271
    %v705 = vunpack.c.l.b16 %v272
    %v706 = vunpack.c.h.b16 %v272
    %v707 = vunpack.c.l.b16 %v273
    %v708 = vunpack.c.h.b16 %v273
    %v709 = vunpack.c.l.b16 %v274
    %v710 = vunpack.c.h.b16 %v274
    %v711 = vunpack.c.l.b16 %v275
    %v712 = vunpack.c.h.b16 %v275
    %v713 = vunpack.c.l.b16 %v276
    %v714 = vunpack.c.h.b16 %v276
    %v715 = vunpack.c.l.b16 %v277
    %v716 = vunpack.c.h.b16 %v277
    %v717 = vunpack.c.l.b16 %v278
    %v718 = vunpack.c.h.b16 %v278
    %v719 = vunpack.c.l.b16 %v279
    %v720 = vunpack.c.h.b16 %v279
    %v721 = vunpack.c.l.b16 %v280
    %v722 = vunpack.c.h.b16 %v280
    %v723 = vunpack.c.l.b16 %v281
    %v724 = vunpack.c.h.b16 %v281
    %v725 = vunpack.c.l.b16 %v282
    %v726 = vunpack.c.h.b16 %v282
    %v727 = vunpack.c.l.b16 %v283
    %v728 = vunpack.c.h.b16 %v283
    %v729 = vunpack.c.l.b16 %v284
    %v730 = vunpack.c.h.b16 %v284
    %v731 = vunpack.c.l.b16 %v285
    %v732 = vunpack.c.h.b16 %v285
    %v733 = vunpack.c.l.b16 %v286
    %v734 = vunpack.c.h.b16 %v286
    %v735 = vunpack.c.l.b16 %v287
    %v736 = vunpack.c.h.b16 %v287
    %v737 = vunpack.c.l.b16 %v288
    %v738 = vunpack.c.h.b16 %v288
    %v739 = vunpack.c.l.b16 %v289
    %v740 = vunpack.c.h.b16 %v289
    %v741 = vunpack.c.l.b16 %v290
    %v742 = vunpack.c.h.b16 %v290
    %v743 = vunpack.c.l.b16 %v291
    %v744 = vunpack.c.h.b16 %v291
    %v745 = vunpack.c.l.b16 %v292
    %v746 = vunpack.c.h.b16 %v292
    %v747 = vunpack.c.l.b16 %v293
    %v748 = vunpack.c.h.b16 %v293
    %v749 = vunpack.c.l.b16 %v294
    %v750 = vunpack.c.h.b16 %v294
    %v751 = vunpack.c.l.b16 %v295
    %v752 = vunpack.c.h.b16 %v295
    %v753 = vunpack.c.l.b16 %v296
    %v754 = vunpack.c.h.b16 %v296
    %v755 = vunpack.c.l.b16 %v297
    %v756 = vunpack.c.h.b16 %v297
    %v757 = vunpack.c.l.b16 %v298
    %v758 = vunpack.c.h.b16 %v298
    %v759 = vunpack.c.l.b16 %v299
    %v760 = vunpack.c.h.b16 %v299
    %v761 = vunpack.c.l.b16 %v300
    %v762 = vunpack.c.h.b16 %v300
    %v763 = vunpack.c.l.b16 %v301
    %v764 = vunpack.c.h.b16 %v301
    %v765 = vunpack.c.l.b16 %v302
    %v766 = vunpack.c.h.b16 %v302
    %v767 = vunpack.c.l.b16 %v303
    %v768 = vunpack.c.h.b16 %v303
    %v769 = vunpack.c.l.b16 %v304
    %v770 = vunpack.c.h.b16 %v304
    %v771 = vunpack.c.l.b16 %v305
    %v772 = vunpack.c.h.b16 %v305
    %v773 = vunpack.c.l.b16 %v306
    %v774 = vunpack.c.h.b16 %v306
    %v775 = vunpack.c.l.b16 %v307
    %v776 = vunpack.c.h.b16 %v307
    %v777 = vunpack.c.l.b16 %v308
    %v778 = vunpack.c.h.b16 %v308
    %v779 = vunpack.c.l.b16 %v309
    %v780 = vunpack.c.h.b16 %v309
    %v781 = vunpack.c.l.b16 %v310
    %v782 = vunpack.c.h.b16 %v310
    %v783 = vunpack.c.l.b16 %v311
    %v784 = vunpack.c.h.b16 %v311
    %v785 = vunpack.c.l.b16 %v312
    %v786 = vunpack.c.h.b16 %v312
    %v787 = vunpack.c.l.b16 %v313
    %v788 = vunpack.c.h.b16 %v313
    %v789 = vunpack.c.l.b16 %v314
    %v790 = vunpack.c.h.b16 %v314
    %v791 = vunpack.c.l.b16 %v315
    %v792 = vunpack.c.h.b16 %v315
    %v793 = vunpack.c.l.b16 %v316
    %v794 = vunpack.c.h.b16 %v316
    %v795 = vunpack.c.l.b16 %v317
    %v796 = vunpack.c.h.b16 %v317
    %v797 = vunpack.c.l.b16 %v318
    %v798 = vunpack.c.h.b16 %v318
    %v799 = vpack.c.b16 %v485, %v483
    %v800 = vpack.c.b16 %v486, %v484
    %v801 = vpack.c.b16 %v489, %v487
    %v802 = vpack.c.b16 %v490, %v488
    %v803 = vpack.c.b16 %v493, %v491
    %v804 = vpack.c.b16 %v494, %v492
    %v805 = vpack.c.b16 %v497, %v495
    %v806 = vpack.c.b16 %v498, %v496
    %v807 = vpack.c.b16 %v501, %v499
    %v808 = vpack.c.b16 %v502, %v500
    %v809 = vpack.c.b16 %v505, %v503
    %v810 = vpack.c.b16 %v506, %v504
    %v811 = vpack.c.b16 %v509, %v507
    %v812 = vpack.c.b16 %v510, %v508
    %v813 = vpack.c.b16 %v513, %v511
    %v814 = vpack.c.b16 %v514, %v512
    %v815 = vpack.c.b16 %v517, %v515
    %v816 = vpack.c.b16 %v518, %v516
    %v817 = vpack.c.b16 %v521, %v519
    %v818 = vpack.c.b16 %v522, %v520
    %v819 = vpack.c.b16 %v525, %v523
    %v820 = vpack.c.b16 %v526, %v524
    %v821 = vpack.c.b16 %v529, %v527
    %v822 = vpack.c.b16 %v530, %v528
    %v823 = vpack.c.b16 %v533, %v531
    %v824 = vpack.c.b16 %v534, %v532
    %v825 = vpack.c.b16 %v537, %v535
    %v826 = vpack.c.b16 %v538, %v536
    %v827 = vpack.c.b16 %v541, %v539
    %v828 = vpack.c.b16 %v542, %v540
    %v829 = vpack.c.b16 %v545, %v543
    %v830 = vpack.c.b16 %v546, %v544
    %v831 = vpack.c.b16 %v549, %v547
    %v832 = vpack.c.b16 %v550, %v548
    %v833 = vpack.c.b16 %v553, %v551
    %v834 = vpack.c.b16 %v554, %v552
    %v835 = vpack.c.b16 %v557, %v555
    %v836 = vpack.c.b16 %v558, %v556
    %v837 = vpack.c.b16 %v561, %v559
    %v838 = vpack.c.b16 %v562, %v560
    %v839 = vpack.c.b16 %v565, %v563
    %v840 = vpack.c.b16 %v566, %v564
    %v841 = vpack.c.b16 %v569, %v567
    %v842 = vpack.c.b16 %v570, %v568
    %v843 = vpack.c.b16 %v573, %v571
    %v844 = vpack.c.b16 %v574, %v572
    %v845 = vpack.c.b16 %v577, %v575
    %v846 = vpack.c.b16 %v578, %v576
    %v847 = vpack.c.b16 %v581, %v579
    %v848 = vpack.c.b16 %v582, %v580
    %v849 = vpack.c.b16 %v585, %v583
    %v850 = vpack.c.b16 %v586, %v584
    %v851 = vpack.c.b16 %v589, %v587
    %v852 = vpack.c.b16 %v590, %v588
    %v853 = vpack.c.b16 %v593, %v591
    %v854 = vpack.c.b16 %v594, %v592
    %v855 = vpack.c.b16 %v597, %v595
    %v856 = vpack.c.b16 %v598, %v596
    %v857 = vpack.c.b16 %v601, %v599
    %v858 = vpack.c.b16 %v602, %v600
    %v859 = vpack.c.b16 %v605, %v603
    %v860 = vpack.c.b16 %v606, %v604
    %v861 = vpack.c.b16 %v609, %v607
    %v862 = vpack.c.b16 %v610, %v608
    %v863 = vpack.c.b16 %v613, %v611
    %v864 = vpack.c.b16 %v614, %v612
    %v865 = vpack.c.b16 %v617, %v615
    %v866 = vpack.c.b16 %v618, %v616
    %v867 = vpack.c.b16 %v621, %v619
    %v868 = vpack.c.b16 %v622, %v620
    %v869 = vpack.c.b16 %v625, %v623
    %v870 = vpack.c.b16 %v626, %v624
    %v871 = vpack.c.b16 %v629, %v627
    %v872 = vpack.c.b16 %v630, %v628
    %v873 = vpack.c.b16 %v633, %v631
    %v874 = vpack.c.b16 %v634, %v632
    %v875 = vpack.c.b16 %v637, %v635
    %v876 = vpack.c.b16 %v638, %v636
    %v877 = vpack.c.b16 %v641, %v639
    %v878 = vpack.c.b16 %v642, %v640
    %v879 = vpack.c.b16 %v645, %v643
    %v880 = vpack.c.b16 %v646, %v644
    %v881 = vpack.c.b16 %v649, %v647
    %v882 = vpack.c.b16 %v650, %v648
    %v883 = vpack.c.b16 %v653, %v651
    %v884 = vpack.c.b16 %v654, %v652
    %v885 = vpack.c.b16 %v657, %v655
    %v886 = vpack.c.b16 %v658, %v656
    %v887 = vpack.c.b16 %v661, %v659
    %v888 = vpack.c.b16 %v662, %v660
    %v889 = vpack.c.b16 %v665, %v663
    %v890 = vpack.c.b16 %v666, %v664
    %v891 = vpack.c.b16 %v669, %v667
    %v892 = vpack.c.b16 %v670, %v668
    %v893 = vpack.c.b16 %v673, %v671
    %v894 = vpack.c.b16 %v674, %v672
    %v895 = vpack.c.b16 %v677, %v675
    %v896 = vpack.c.b16 %v678, %v676
    %v897 = vpack.c.b16 %v681, %v679
    %v898 = vpack.c.b16 %v682, %v680
    %v899 = vpack.c.b16 %v685, %v683
    %v900 = vpack.c.b16 %v686, %v684
    %v901 = vpack.c.b16 %v689, %v687
    %v902 = vpack.c.b16 %v690, %v688
    %v903 = vpack.c.b16 %v693, %v691
    %v904 = vpack.c.b16 %v694, %v692
    %v905 = vpack.c.b16 %v697, %v695
    %v906 = vpack.c.b16 %v698, %v696
    %v907 = vpack.c.b16 %v701, %v699
    %v908 = vpack.c.b16 %v702, %v700
    %v909 = vpack.c.b16 %v705, %v703
    %v910 = vpack.c.b16 %v706, %v704
    %v911 = vpack.c.b16 %v709, %v707
    %v912 = vpack.c.b16 %v710, %v708
    %v913 = vpack.c.b16 %v713, %v711
    %v914 = vpack.c.b16 %v714, %v712
    %v915 = vpack.c.b16 %v717, %v715
    %v916 = vpack.c.b16 %v718, %v716
    %v917 = vpack.c.b16 %v721, %v719
    %v918 = vpack.c.b16 %v722, %v720
    %v919 = vpack.c.b16 %v725, %v723
    %v920 = vpack.c.b16 %v726, %v724
    %v921 = vpack.c.b16 %v729, %v727
    %v922 = vpack.c.b16 %v730, %v728
    %v923 = vpack.c.b16 %v733, %v731
    %v924 = vpack.c.b16 %v734, %v732
    %v925 = vpack.c.b16 %v737, %v735
    %v926 = vpack.c.b16 %v738, %v736
    %v927 = vpack.c.b16 %v741, %v739
    %v928 = vpack.c.b16 %v742, %v740
    %v929 = vpack.c.b16 %v745, %v743
    %v930 = vpack.c.b16 %v746, %v744
    %v931 = vpack.c.b16 %v749, %v747
    %v932 = vpack.c.b16 %v750, %v748
    %v933 = vpack.c.b16 %v753, %v751
    %v934 = vpack.c.b16 %v754, %v752
    %v935 = vpack.c.b16 %v757, %v755
    %v936 = vpack.c.b16 %v758, %v756
    %v937 = vpack.c.b16 %v761, %v759
    %v938 = vpack.c.b16 %v762, %v760
    %v939 = vpack.c.b16 %v765, %v763
    %v940 = vpack.c.b16 %v766, %v764
    %v941 = vpack.c.b16 %v769, %v767
    %v942 = vpack.c.b16 %v770, %v768
    %v943 = vpack.c.b16 %v773, %v771
    %v944 = vpack.c.b16 %v774, %v772
    %v945 = vpack.c.b16 %v777, %v775
    %v946 = vpack.c.b16 %v778, %v776
    %v947 = vpack.c.b16 %v781, %v779
    %v948 = vpack.c.b16 %v782, %v780
    %v949 = vpack.c.b16 %v785, %v783
    %v950 = vpack.c.b16 %v786, %v784
    %v951 = vpack.c.b16 %v789, %v787
    %v952 = vpack.c.b16 %v790, %v788
    %v953 = vpack.c.b16 %v793, %v791
    %v954 = vpack.c.b16 %v794, %v792
    %v955 = vpack.c.b16 %v797, %v795
    %v956 = vpack.c.b16 %v798, %v796
    %vm1113 = vcmask 883712
    %v1115 = vsel %vm1113, %v160, 0
    %vm1117 = vcmask 1045504
    %v1119 = vsel %vm1117, %v955, 0
    %v1122 = vsel %vm1117, %v956, 0
    %1124 = vmatpush.bf16.msra.mxu0 %v813
    %1125 = vmatpush.bf16.msra.mxu0 %v811
    %1126 = vmatpush.bf16.msra.mxu0 %v809
    %1127 = vmatpush.bf16.msra.mxu0 %v807
    %1128 = vmatpush.bf16.msra.mxu0 %v805
    %1129 = vmatpush.bf16.msra.mxu0 %v803
    %1130 = vmatpush.bf16.msra.mxu0 %v801
    %1131 = vmatpush.bf16.msra.mxu0 %v799
    %1132 = vmatmul.bf16.gmra.mxu0 %v151
    %v1133 = vpop.f32.mrf.mxu0
    %v1134 = vadd.f32 %v321, %v1133
    %v1135 = vpop.f32.mrf.mxu0
    %1136 = vdwg.mxu0
    %1137 = vmatpush.bf16.msra.mxu0 %v829
    %1138 = vmatpush.bf16.msra.mxu0 %v827
    %1139 = vmatpush.bf16.msra.mxu0 %v825
    %1140 = vmatpush.bf16.msra.mxu0 %v823
    %1141 = vmatpush.bf16.msra.mxu0 %v821
    %1142 = vmatpush.bf16.msra.mxu0 %v819
    %1143 = vmatpush.bf16.msra.mxu0 %v817
    %1144 = vmatpush.bf16.msra.mxu0 %v815
    %1145 = vmatmul.bf16.gmra.mxu0 %v152
    %v1146 = vpop.f32.mrf.mxu0
    %v1147 = vadd.f32 %v1134, %v1146
    %v1148 = vpop.f32.mrf.mxu0
    %1149 = vdwg.mxu0
    %1150 = vmatpush.bf16.msra.mxu0 %v845
    %1151 = vmatpush.bf16.msra.mxu0 %v843
    %1152 = vmatpush.bf16.msra.mxu0 %v841
    %1153 = vmatpush.bf16.msra.mxu0 %v839
    %1154 = vmatpush.bf16.msra.mxu0 %v837
    %1155 = vmatpush.bf16.msra.mxu0 %v835
    %1156 = vmatpush.bf16.msra.mxu0 %v833
    %1157 = vmatpush.bf16.msra.mxu0 %v831
    %1158 = vmatmul.bf16.gmra.mxu0 %v153
    %v1159 = vpop.f32.mrf.mxu0
    %v1160 = vadd.f32 %v1147, %v1159
    %v1161 = vpop.f32.mrf.mxu0
    %1162 = vdwg.mxu0
    %1163 = vmatpush.bf16.msra.mxu0 %v861
    %1164 = vmatpush.bf16.msra.mxu0 %v859
    %1165 = vmatpush.bf16.msra.mxu0 %v857
    %1166 = vmatpush.bf16.msra.mxu0 %v855
    %1167 = vmatpush.bf16.msra.mxu0 %v853
    %1168 = vmatpush.bf16.msra.mxu0 %v851
    %1169 = vmatpush.bf16.msra.mxu0 %v849
    %1170 = vmatpush.bf16.msra.mxu0 %v847
    %1171 = vmatmul.bf16.gmra.mxu0 %v154
    %v1172 = vpop.f32.mrf.mxu0
    %v1173 = vadd.f32 %v1160, %v1172
    %v1174 = vpop.f32.mrf.mxu0
    %1175 = vdwg.mxu0
    %1176 = vmatpush.bf16.msra.mxu0 %v877
    %1177 = vmatpush.bf16.msra.mxu0 %v875
    %1178 = vmatpush.bf16.msra.mxu0 %v873
    %1179 = vmatpush.bf16.msra.mxu0 %v871
    %1180 = vmatpush.bf16.msra.mxu0 %v869
    %1181 = vmatpush.bf16.msra.mxu0 %v867
    %1182 = vmatpush.bf16.msra.mxu0 %v865
    %1183 = vmatpush.bf16.msra.mxu0 %v863
    %1184 = vmatmul.bf16.gmra.mxu0 %v155
    %v1185 = vpop.f32.mrf.mxu0
    %v1186 = vadd.f32 %v1173, %v1185
    %v1187 = vpop.f32.mrf.mxu0
    %1188 = vdwg.mxu0
    %1189 = vmatpush.bf16.msra.mxu0 %v893
    %1190 = vmatpush.bf16.msra.mxu0 %v891
    %1191 = vmatpush.bf16.msra.mxu0 %v889
    %1192 = vmatpush.bf16.msra.mxu0 %v887
    %1193 = vmatpush.bf16.msra.mxu0 %v885
    %1194 = vmatpush.bf16.msra.mxu0 %v883
    %1195 = vmatpush.bf16.msra.mxu0 %v881
    %1196 = vmatpush.bf16.msra.mxu0 %v879
    %1197 = vmatmul.bf16.gmra.mxu0 %v156
    %v1198 = vpop.f32.mrf.mxu0
    %v1199 = vadd.f32 %v1186, %v1198
    %v1200 = vpop.f32.mrf.mxu0
    %1201 = vdwg.mxu0
    %1202 = vmatpush.bf16.msra.mxu0 %v909
    %1203 = vmatpush.bf16.msra.mxu0 %v907
    %1204 = vmatpush.bf16.msra.mxu0 %v905
    %1205 = vmatpush.bf16.msra.mxu0 %v903
    %1206 = vmatpush.bf16.msra.mxu0 %v901
    %1207 = vmatpush.bf16.msra.mxu0 %v899
    %1208 = vmatpush.bf16.msra.mxu0 %v897
    %1209 = vmatpush.bf16.msra.mxu0 %v895
    %1210 = vmatmul.bf16.gmra.mxu0 %v157
    %v1211 = vpop.f32.mrf.mxu0
    %v1212 = vadd.f32 %v1199, %v1211
    %v1213 = vpop.f32.mrf.mxu0
    %1214 = vdwg.mxu0
    %1215 = vmatpush.bf16.msra.mxu0 %v925
    %1216 = vmatpush.bf16.msra.mxu0 %v923
    %1217 = vmatpush.bf16.msra.mxu0 %v921
    %1218 = vmatpush.bf16.msra.mxu0 %v919
    %1219 = vmatpush.bf16.msra.mxu0 %v917
    %1220 = vmatpush.bf16.msra.mxu0 %v915
    %1221 = vmatpush.bf16.msra.mxu0 %v913
    %1222 = vmatpush.bf16.msra.mxu0 %v911
    %1223 = vmatmul.bf16.gmra.mxu0 %v158
    %v1224 = vpop.f32.mrf.mxu0
    %v1225 = vadd.f32 %v1212, %v1224
    %v1226 = vpop.f32.mrf.mxu0
    %1227 = vdwg.mxu0
    %1228 = vmatpush.bf16.msra.mxu0 %v941
    %1229 = vmatpush.bf16.msra.mxu0 %v939
    %1230 = vmatpush.bf16.msra.mxu0 %v937
    %1231 = vmatpush.bf16.msra.mxu0 %v935
    %1232 = vmatpush.bf16.msra.mxu0 %v933
    %1233 = vmatpush.bf16.msra.mxu0 %v931
    %1234 = vmatpush.bf16.msra.mxu0 %v929
    %1235 = vmatpush.bf16.msra.mxu0 %v927
    %1236 = vmatmul.bf16.gmra.mxu0 %v159
    %v1237 = vpop.f32.mrf.mxu0
    %v1238 = vadd.f32 %v1225, %v1237
    %v1239 = vpop.f32.mrf.mxu0
    %1240 = vdwg.mxu0
    %1241 = vmatpush.bf16.msra.mxu0 0
    %1242 = vmatpush.bf16.msra.mxu0 %v1119
    %1243 = vmatpush.bf16.msra.mxu0 %v953
    %1244 = vmatpush.bf16.msra.mxu0 %v951
    %1245 = vmatpush.bf16.msra.mxu0 %v949
    %1246 = vmatpush.bf16.msra.mxu0 %v947
    %1247 = vmatpush.bf16.msra.mxu0 %v945
    %1248 = vmatpush.bf16.msra.mxu0 %v943
    %1249 = vmatmul.bf16.gmra.mxu0 %v1115
    %v1250 = vpop.f32.mrf.mxu0
    %v1251 = vadd.f32 %v1238, %v1250
    %v1252 = vpop.f32.mrf.mxu0
    %1253 = vdwg.mxu0
    %1254 = vmatpush.bf16.msra.mxu0 %v814
    %1255 = vmatpush.bf16.msra.mxu0 %v812
    %1256 = vmatpush.bf16.msra.mxu0 %v810
    %1257 = vmatpush.bf16.msra.mxu0 %v808
    %1258 = vmatpush.bf16.msra.mxu0 %v806
    %1259 = vmatpush.bf16.msra.mxu0 %v804
    %1260 = vmatpush.bf16.msra.mxu0 %v802
    %1261 = vmatpush.bf16.msra.mxu0 %v800
    %1262 = vmatmul.bf16.gmra.mxu0 %v151
    %v1263 = vpop.f32.mrf.mxu0
    %v1264 = vadd.f32 %v322, %v1263
    %v1265 = vpop.f32.mrf.mxu0
    %1266 = vdwg.mxu0
    %1267 = vmatpush.bf16.msra.mxu0 %v830
    %1268 = vmatpush.bf16.msra.mxu0 %v828
    %1269 = vmatpush.bf16.msra.mxu0 %v826
    %1270 = vmatpush.bf16.msra.mxu0 %v824
    %1271 = vmatpush.bf16.msra.mxu0 %v822
    %1272 = vmatpush.bf16.msra.mxu0 %v820
    %1273 = vmatpush.bf16.msra.mxu0 %v818
    %1274 = vmatpush.bf16.msra.mxu0 %v816
    %1275 = vmatmul.bf16.gmra.mxu0 %v152
    %v1276 = vpop.f32.mrf.mxu0
    %v1277 = vadd.f32 %v1264, %v1276
    %v1278 = vpop.f32.mrf.mxu0
    %1279 = vdwg.mxu0
    %1280 = vmatpush.bf16.msra.mxu0 %v846
    %1281 = vmatpush.bf16.msra.mxu0 %v844
    %1282 = vmatpush.bf16.msra.mxu0 %v842
    %1283 = vmatpush.bf16.msra.mxu0 %v840
    %1284 = vmatpush.bf16.msra.mxu0 %v838
    %1285 = vmatpush.bf16.msra.mxu0 %v836
    %1286 = vmatpush.bf16.msra.mxu0 %v834
    %1287 = vmatpush.bf16.msra.mxu0 %v832
    %1288 = vmatmul.bf16.gmra.mxu0 %v153
    %v1289 = vpop.f32.mrf.mxu0
    %v1290 = vadd.f32 %v1277, %v1289
    %v1291 = vpop.f32.mrf.mxu0
    %1292 = vdwg.mxu0
    %1293 = vmatpush.bf16.msra.mxu0 %v862
    %1294 = vmatpush.bf16.msra.mxu0 %v860
    %1295 = vmatpush.bf16.msra.mxu0 %v858
    %1296 = vmatpush.bf16.msra.mxu0 %v856
    %1297 = vmatpush.bf16.msra.mxu0 %v854
    %1298 = vmatpush.bf16.msra.mxu0 %v852
    %1299 = vmatpush.bf16.msra.mxu0 %v850
    %1300 = vmatpush.bf16.msra.mxu0 %v848
    %1301 = vmatmul.bf16.gmra.mxu0 %v154
    %v1302 = vpop.f32.mrf.mxu0
    %v1303 = vadd.f32 %v1290, %v1302
    %v1304 = vpop.f32.mrf.mxu0
    %1305 = vdwg.mxu0
    %1306 = vmatpush.bf16.msra.mxu0 %v878
    %1307 = vmatpush.bf16.msra.mxu0 %v876
    %1308 = vmatpush.bf16.msra.mxu0 %v874
    %1309 = vmatpush.bf16.msra.mxu0 %v872
    %1310 = vmatpush.bf16.msra.mxu0 %v870
    %1311 = vmatpush.bf16.msra.mxu0 %v868
    %1312 = vmatpush.bf16.msra.mxu0 %v866
    %1313 = vmatpush.bf16.msra.mxu0 %v864
    %1314 = vmatmul.bf16.gmra.mxu0 %v155
    %v1315 = vpop.f32.mrf.mxu0
    %v1316 = vadd.f32 %v1303, %v1315
    %v1317 = vpop.f32.mrf.mxu0
    %1318 = vdwg.mxu0
    %1319 = vmatpush.bf16.msra.mxu0 %v894
    %1320 = vmatpush.bf16.msra.mxu0 %v892
    %1321 = vmatpush.bf16.msra.mxu0 %v890
    %1322 = vmatpush.bf16.msra.mxu0 %v888
    %1323 = vmatpush.bf16.msra.mxu0 %v886
    %1324 = vmatpush.bf16.msra.mxu0 %v884
    %1325 = vmatpush.bf16.msra.mxu0 %v882
    %1326 = vmatpush.bf16.msra.mxu0 %v880
    %1327 = vmatmul.bf16.gmra.mxu0 %v156
    %v1328 = vpop.f32.mrf.mxu0
    %v1329 = vadd.f32 %v1316, %v1328
    %v1330 = vpop.f32.mrf.mxu0
    %1331 = vdwg.mxu0
    %1332 = vmatpush.bf16.msra.mxu0 %v910
    %1333 = vmatpush.bf16.msra.mxu0 %v908
    %1334 = vmatpush.bf16.msra.mxu0 %v906
    %1335 = vmatpush.bf16.msra.mxu0 %v904
    %1336 = vmatpush.bf16.msra.mxu0 %v902
    %1337 = vmatpush.bf16.msra.mxu0 %v900
    %1338 = vmatpush.bf16.msra.mxu0 %v898
    %1339 = vmatpush.bf16.msra.mxu0 %v896
    %1340 = vmatmul.bf16.gmra.mxu0 %v157
    %v1341 = vpop.f32.mrf.mxu0
    %v1342 = vadd.f32 %v1329, %v1341
    %v1343 = vpop.f32.mrf.mxu0
    %1344 = vdwg.mxu0
    %1345 = vmatpush.bf16.msra.mxu0 %v926
    %1346 = vmatpush.bf16.msra.mxu0 %v924
    %1347 = vmatpush.bf16.msra.mxu0 %v922
    %1348 = vmatpush.bf16.msra.mxu0 %v920
    %1349 = vmatpush.bf16.msra.mxu0 %v918
    %1350 = vmatpush.bf16.msra.mxu0 %v916
    %1351 = vmatpush.bf16.msra.mxu0 %v914
    %1352 = vmatpush.bf16.msra.mxu0 %v912
    %1353 = vmatmul.bf16.gmra.mxu0 %v158
    %v1354 = vpop.f32.mrf.mxu0
    %v1355 = vadd.f32 %v1342, %v1354
    %v1356 = vpop.f32.mrf.mxu0
    %1357 = vdwg.mxu0
    %1358 = vmatpush.bf16.msra.mxu0 %v942
    %1359 = vmatpush.bf16.msra.mxu0 %v940
    %1360 = vmatpush.bf16.msra.mxu0 %v938
    %1361 = vmatpush.bf16.msra.mxu0 %v936
    %1362 = vmatpush.bf16.msra.mxu0 %v934
    %1363 = vmatpush.bf16.msra.mxu0 %v932
    %1364 = vmatpush.bf16.msra.mxu0 %v930
    %1365 = vmatpush.bf16.msra.mxu0 %v928
    %1366 = vmatmul.bf16.gmra.mxu0 %v159
    %v1367 = vpop.f32.mrf.mxu0
    %v1368 = vadd.f32 %v1355, %v1367
    %v1369 = vpop.f32.mrf.mxu0
    %1370 = vdwg.mxu0
    %1371 = vmatpush.bf16.msra.mxu0 0
    %1372 = vmatpush.bf16.msra.mxu0 %v1122
    %1373 = vmatpush.bf16.msra.mxu0 %v954
    %1374 = vmatpush.bf16.msra.mxu0 %v952
    %1375 = vmatpush.bf16.msra.mxu0 %v950
    %1376 = vmatpush.bf16.msra.mxu0 %v948
    %1377 = vmatpush.bf16.msra.mxu0 %v946
    %1378 = vmatpush.bf16.msra.mxu0 %v944
    %1379 = vmatmul.bf16.gmra.mxu0 %v1115
    %v1380 = vpop.f32.mrf.mxu0
    %v1381 = vadd.f32 %v1368, %v1380
    %v1382 = vpop.f32.mrf.mxu0
    %1383 = vdwg.mxu0
    %v1384 = vld [vmem:[%s3] sm:$0x3]
    %v1385 = vld [vmem:[#allocation8] sm:$0x3]
    %v1386 = vadd.f32 %v1251, %v1381
    %1387 = vadd.xlane.f32.xlu0 %v1386
    %v1388 = vpop.xlane.xlu0 %1387
    %v1389 = vmul.f32 %v1388, 0.00390625
    %v1390 = vmul.f32 %v1251, %v1251
    %v1391 = vmul.f32 %v1381, %v1381
    %v1392 = vadd.f32 %v1390, %v1391
    %1393 = vadd.xlane.f32.xlu0 %v1392
    %v1394 = vpop.xlane.xlu0 %1393
    %v1395 = vmul.f32 %v1394, 0.00390625
    %v1396 = vmul.f32 %v1389, %v1389
    %v1397 = vsub.f32 %v1395, %v1396
    %v1398 = vsub.f32 %v1251, %v1389
    %v1399 = vsub.f32 %v1381, %v1389
    %v1400 = vadd.f32 %v1397, 1e-05
    %v1401 = vrsqrt.pop %v1400
    %v1402 = vmul.f32 %v1401, %v1400
    %v1403 = vmul.f32 %v1402, %v1401
    %v1404 = vmul.f32 0.5, %v1403
    %v1405 = vsub.f32 1.5, %v1404
    %v1406 = vmul.f32 %v1401, %v1405
    %vm1407 = vweird.f32 %v1400
    %vm1408 = vweird.f32 %v1401
    %vm1409 = vmor %vm1407, %vm1408
    %v1410 = vsel %vm1409, %v1401, %v1406
    %v1411 = vmul.f32 %v1398, %v1410
    %v1412 = vmul.f32 %v1399, %v1410
    %v1414 = vperm.slane %v1384, 0
    %v1415 = vperm.slane %v1384, 1
    %v1418 = vmul.f32 %v1411, %v1414
    %v1419 = vmul.f32 %v1412, %v1415
    %v1421 = vperm.slane %v1385, 0
    %v1422 = vperm.slane %v1385, 1
    %v1425 = vadd.f32 %v1418, %v1421
    %v1426 = vadd.f32 %v1419, %v1422
    %v1427 = vtanh.pop %v1425
    %v1428 = vtanh.pop %v1426
    %v1429 = vpack.c.bf16 %v1427, %v1427
    %v1430 = vpack.c.bf16 %v1428, %v1428
    %v1431 = vld [vmem:[#allocation10] sm:$0xff]
    %v1432 = vld [vmem:[#allocation10 + $0x8] sm:$0xff]
    %v1433 = vld [vmem:[#allocation10 + $0x10] sm:$0xff]
    %v1434 = vld [vmem:[#allocation10 + $0x18] sm:$0xff]
    %v1435 = vld [vmem:[#allocation10 + $0x20] sm:$0xff]
    %v1436 = vld [vmem:[#allocation10 + $0x28] sm:$0xff]
    %v1437 = vld [vmem:[#allocation10 + $0x30] sm:$0xff]
    %v1438 = vld [vmem:[#allocation10 + $0x38] sm:$0xff]
    %v1439 = vld [vmem:[#allocation10 + $0x40] sm:$0xff]
    %v1440 = vld [vmem:[#allocation10 + $0x48] sm:$0xff]
    %v1441 = vld [vmem:[#allocation10 + $0x50] sm:$0xff]
    %v1442 = vld [vmem:[#allocation10 + $0x58] sm:$0xff]
    %v1443 = vld [vmem:[#allocation10 + $0x60] sm:$0xff]
    %v1444 = vld [vmem:[#allocation10 + $0x68] sm:$0xff]
    %v1445 = vld [vmem:[#allocation10 + $0x70] sm:$0xff]
    %v1446 = vld [vmem:[#allocation10 + $0x78] sm:$0xff]
    %v1447 = vld [vmem:[#allocation10 + $0x80] sm:$0xff]
    %v1448 = vld [vmem:[#allocation10 + $0x88] sm:$0xff]
    %v1449 = vld [vmem:[#allocation10 + $0x90] sm:$0xff]
    %v1450 = vld [vmem:[#allocation10 + $0x98] sm:$0xff]
    %v1451 = vld [vmem:[#allocation10 + $0xa0] sm:$0xff]
    %v1452 = vld [vmem:[#allocation10 + $0xa8] sm:$0xff]
    %v1453 = vld [vmem:[#allocation10 + $0xb0] sm:$0xff]
    %v1454 = vld [vmem:[#allocation10 + $0xb8] sm:$0xff]
    %v1455 = vld [vmem:[#allocation10 + $0xc0] sm:$0xff]
    %v1456 = vld [vmem:[#allocation10 + $0xc8] sm:$0xff]
    %v1457 = vld [vmem:[#allocation10 + $0xd0] sm:$0xff]
    %v1458 = vld [vmem:[#allocation10 + $0xd8] sm:$0xff]
    %v1459 = vld [vmem:[#allocation10 + $0xe0] sm:$0xff]
    %v1460 = vld [vmem:[#allocation10 + $0xe8] sm:$0xff]
    %v1461 = vld [vmem:[#allocation10 + $0xf0] sm:$0xff]
    %v1462 = vld [vmem:[#allocation10 + $0xf8] sm:$0xff]
    %v1463 = vld [vmem:[%s6] sm:$0x3]
    %v1465 = vperm.slane %v1463, 0
    %v1466 = vperm.slane %v1463, 1
    %v1501 = vunpack.c.l.b16 %v1431
    %v1502 = vunpack.c.h.b16 %v1431
    %v1503 = vunpack.c.l.b16 %v1432
    %v1504 = vunpack.c.h.b16 %v1432
    %v1505 = vunpack.c.l.b16 %v1433
    %v1506 = vunpack.c.h.b16 %v1433
    %v1507 = vunpack.c.l.b16 %v1434
    %v1508 = vunpack.c.h.b16 %v1434
    %v1509 = vunpack.c.l.b16 %v1435
    %v1510 = vunpack.c.h.b16 %v1435
    %v1511 = vunpack.c.l.b16 %v1436
    %v1512 = vunpack.c.h.b16 %v1436
    %v1513 = vunpack.c.l.b16 %v1437
    %v1514 = vunpack.c.h.b16 %v1437
    %v1515 = vunpack.c.l.b16 %v1438
    %v1516 = vunpack.c.h.b16 %v1438
    %v1517 = vunpack.c.l.b16 %v1439
    %v1518 = vunpack.c.h.b16 %v1439
    %v1519 = vunpack.c.l.b16 %v1440
    %v1520 = vunpack.c.h.b16 %v1440
    %v1521 = vunpack.c.l.b16 %v1441
    %v1522 = vunpack.c.h.b16 %v1441
    %v1523 = vunpack.c.l.b16 %v1442
    %v1524 = vunpack.c.h.b16 %v1442
    %v1525 = vunpack.c.l.b16 %v1443
    %v1526 = vunpack.c.h.b16 %v1443
    %v1527 = vunpack.c.l.b16 %v1444
    %v1528 = vunpack.c.h.b16 %v1444
    %v1529 = vunpack.c.l.b16 %v1445
    %v1530 = vunpack.c.h.b16 %v1445
    %v1531 = vunpack.c.l.b16 %v1446
    %v1532 = vunpack.c.h.b16 %v1446
    %v1533 = vunpack.c.l.b16 %v1447
    %v1534 = vunpack.c.h.b16 %v1447
    %v1535 = vunpack.c.l.b16 %v1448
    %v1536 = vunpack.c.h.b16 %v1448
    %v1537 = vunpack.c.l.b16 %v1449
    %v1538 = vunpack.c.h.b16 %v1449
    %v1539 = vunpack.c.l.b16 %v1450
    %v1540 = vunpack.c.h.b16 %v1450
    %v1541 = vunpack.c.l.b16 %v1451
    %v1542 = vunpack.c.h.b16 %v1451
    %v1543 = vunpack.c.l.b16 %v1452
    %v1544 = vunpack.c.h.b16 %v1452
    %v1545 = vunpack.c.l.b16 %v1453
    %v1546 = vunpack.c.h.b16 %v1453
    %v1547 = vunpack.c.l.b16 %v1454
    %v1548 = vunpack.c.h.b16 %v1454
    %v1549 = vunpack.c.l.b16 %v1455
    %v1550 = vunpack.c.h.b16 %v1455
    %v1551 = vunpack.c.l.b16 %v1456
    %v1552 = vunpack.c.h.b16 %v1456
    %v1553 = vunpack.c.l.b16 %v1457
    %v1554 = vunpack.c.h.b16 %v1457
    %v1555 = vunpack.c.l.b16 %v1458
    %v1556 = vunpack.c.h.b16 %v1458
    %v1557 = vunpack.c.l.b16 %v1459
    %v1558 = vunpack.c.h.b16 %v1459
    %v1559 = vunpack.c.l.b16 %v1460
    %v1560 = vunpack.c.h.b16 %v1460
    %v1561 = vunpack.c.l.b16 %v1461
    %v1562 = vunpack.c.h.b16 %v1461
    %v1563 = vunpack.c.l.b16 %v1462
    %v1564 = vunpack.c.h.b16 %v1462
    %v1565 = vpack.c.b16 %v1503, %v1501
    %v1566 = vpack.c.b16 %v1504, %v1502
    %v1567 = vpack.c.b16 %v1507, %v1505
    %v1568 = vpack.c.b16 %v1508, %v1506
    %v1569 = vpack.c.b16 %v1511, %v1509
    %v1570 = vpack.c.b16 %v1512, %v1510
    %v1571 = vpack.c.b16 %v1515, %v1513
    %v1572 = vpack.c.b16 %v1516, %v1514
    %v1573 = vpack.c.b16 %v1519, %v1517
    %v1574 = vpack.c.b16 %v1520, %v1518
    %v1575 = vpack.c.b16 %v1523, %v1521
    %v1576 = vpack.c.b16 %v1524, %v1522
    %v1577 = vpack.c.b16 %v1527, %v1525
    %v1578 = vpack.c.b16 %v1528, %v1526
    %v1579 = vpack.c.b16 %v1531, %v1529
    %v1580 = vpack.c.b16 %v1532, %v1530
    %v1581 = vpack.c.b16 %v1535, %v1533
    %v1582 = vpack.c.b16 %v1536, %v1534
    %v1583 = vpack.c.b16 %v1539, %v1537
    %v1584 = vpack.c.b16 %v1540, %v1538
    %v1585 = vpack.c.b16 %v1543, %v1541
    %v1586 = vpack.c.b16 %v1544, %v1542
    %v1587 = vpack.c.b16 %v1547, %v1545
    %v1588 = vpack.c.b16 %v1548, %v1546
    %v1589 = vpack.c.b16 %v1551, %v1549
    %v1590 = vpack.c.b16 %v1552, %v1550
    %v1591 = vpack.c.b16 %v1555, %v1553
    %v1592 = vpack.c.b16 %v1556, %v1554
    %v1593 = vpack.c.b16 %v1559, %v1557
    %v1594 = vpack.c.b16 %v1560, %v1558
    %v1595 = vpack.c.b16 %v1563, %v1561
    %v1596 = vpack.c.b16 %v1564, %v1562
    %1629 = vmatpush.bf16.msra.mxu0 %v1579
    %1630 = vmatpush.bf16.msra.mxu0 %v1577
    %1631 = vmatpush.bf16.msra.mxu0 %v1575
    %1632 = vmatpush.bf16.msra.mxu0 %v1573
    %1633 = vmatpush.bf16.msra.mxu0 %v1571
    %1634 = vmatpush.bf16.msra.mxu0 %v1569
    %1635 = vmatpush.bf16.msra.mxu0 %v1567
    %1636 = vmatpush.bf16.msra.mxu0 %v1565
    %1637 = vmatmul.bf16.gmra.mxu0 %v1429
    %v1638 = vpop.f32.mrf.mxu0
    %v1639 = vadd.f32 %v1465, %v1638
    %v1640 = vpop.f32.mrf.mxu0
    %1641 = vdwg.mxu0
    %1642 = vmatpush.bf16.msra.mxu0 %v1595
    %1643 = vmatpush.bf16.msra.mxu0 %v1593
    %1644 = vmatpush.bf16.msra.mxu0 %v1591
    %1645 = vmatpush.bf16.msra.mxu0 %v1589
    %1646 = vmatpush.bf16.msra.mxu0 %v1587
    %1647 = vmatpush.bf16.msra.mxu0 %v1585
    %1648 = vmatpush.bf16.msra.mxu0 %v1583
    %1649 = vmatpush.bf16.msra.mxu0 %v1581
    %1650 = vmatmul.bf16.gmra.mxu0 %v1430
    %v1651 = vpop.f32.mrf.mxu0
    %v1652 = vadd.f32 %v1639, %v1651
    %v1653 = vpop.f32.mrf.mxu0
    %1654 = vdwg.mxu0
    %1655 = vmatpush.bf16.msra.mxu0 %v1580
    %1656 = vmatpush.bf16.msra.mxu0 %v1578
    %1657 = vmatpush.bf16.msra.mxu0 %v1576
    %1658 = vmatpush.bf16.msra.mxu0 %v1574
    %1659 = vmatpush.bf16.msra.mxu0 %v1572
    %1660 = vmatpush.bf16.msra.mxu0 %v1570
    %1661 = vmatpush.bf16.msra.mxu0 %v1568
    %1662 = vmatpush.bf16.msra.mxu0 %v1566
    %1663 = vmatmul.bf16.gmra.mxu0 %v1429
    %v1664 = vpop.f32.mrf.mxu0
    %v1665 = vadd.f32 %v1466, %v1664
    %v1666 = vpop.f32.mrf.mxu0
    %1667 = vdwg.mxu0
    %1668 = vmatpush.bf16.msra.mxu0 %v1596
    %1669 = vmatpush.bf16.msra.mxu0 %v1594
    %1670 = vmatpush.bf16.msra.mxu0 %v1592
    %1671 = vmatpush.bf16.msra.mxu0 %v1590
    %1672 = vmatpush.bf16.msra.mxu0 %v1588
    %1673 = vmatpush.bf16.msra.mxu0 %v1586
    %1674 = vmatpush.bf16.msra.mxu0 %v1584
    %1675 = vmatpush.bf16.msra.mxu0 %v1582
    %1676 = vmatmul.bf16.gmra.mxu0 %v1430
    %v1677 = vpop.f32.mrf.mxu0
    %v1678 = vadd.f32 %v1665, %v1677
    %v1679 = vpop.f32.mrf.mxu0
    %1680 = vdwg.mxu0
    %v1681 = vld [vmem:[%s7] sm:$0x3]
    %v1682 = vld [vmem:[#allocation11] sm:$0x3]
    %v1683 = vadd.f32 %v1652, %v1678
    %1684 = vadd.xlane.f32.xlu0 %v1683
    %v1685 = vpop.xlane.xlu0 %1684
    %v1686 = vmul.f32 %v1685, 0.00390625
    %v1687 = vmul.f32 %v1652, %v1652
    %v1688 = vmul.f32 %v1678, %v1678
    %v1689 = vadd.f32 %v1687, %v1688
    %1690 = vadd.xlane.f32.xlu0 %v1689
    %v1691 = vpop.xlane.xlu0 %1690
    %v1692 = vmul.f32 %v1691, 0.00390625
    %v1693 = vmul.f32 %v1686, %v1686
    %v1694 = vsub.f32 %v1692, %v1693
    %v1695 = vsub.f32 %v1652, %v1686
    %v1696 = vsub.f32 %v1678, %v1686
    %v1697 = vadd.f32 %v1694, 1e-05
    %v1698 = vrsqrt.pop %v1697
    %v1699 = vmul.f32 %v1698, %v1697
    %v1700 = vmul.f32 %v1699, %v1698
    %v1701 = vmul.f32 0.5, %v1700
    %v1702 = vsub.f32 1.5, %v1701
    %v1703 = vmul.f32 %v1698, %v1702
    %vm1704 = vweird.f32 %v1697
    %vm1705 = vweird.f32 %v1698
    %vm1706 = vmor %vm1704, %vm1705
    %v1707 = vsel %vm1706, %v1698, %v1703
    %v1708 = vmul.f32 %v1695, %v1707
    %v1709 = vmul.f32 %v1696, %v1707
    %v1711 = vperm.slane %v1681, 0
    %v1712 = vperm.slane %v1681, 1
    %v1715 = vmul.f32 %v1708, %v1711
    %v1716 = vmul.f32 %v1709, %v1712
    %v1718 = vperm.slane %v1682, 0
    %v1719 = vperm.slane %v1682, 1
    %v1722 = vadd.f32 %v1715, %v1718
    %v1723 = vadd.f32 %v1716, %v1719
    %v1724 = vtanh.pop %v1722
    %v1725 = vtanh.pop %v1723
    %v1726 = vpack.c.bf16 %v1724, %v1724
    %v1727 = vpack.c.bf16 %v1725, %v1725
    %v1728 = vld [vmem:[#allocation13] sm:$0xf]
    %v1729 = vld [vmem:[#allocation13 + $0x4] sm:$0xf]
    %v1730 = vld [vmem:[#allocation13 + $0x8] sm:$0xf]
    %v1731 = vld [vmem:[#allocation13 + $0xc] sm:$0xf]
    %v1732 = vld [vmem:[#allocation13 + $0x10] sm:$0xf]
    %v1733 = vld [vmem:[#allocation13 + $0x14] sm:$0xf]
    %v1734 = vld [vmem:[#allocation13 + $0x18] sm:$0xf]
    %v1735 = vld [vmem:[#allocation13 + $0x1c] sm:$0xf]
    %v1736 = vld [vmem:[#allocation13 + $0x20] sm:$0xf]
    %v1737 = vld [vmem:[#allocation13 + $0x24] sm:$0xf]
    %v1738 = vld [vmem:[#allocation13 + $0x28] sm:$0xf]
    %v1739 = vld [vmem:[#allocation13 + $0x2c] sm:$0xf]
    %v1740 = vld [vmem:[#allocation13 + $0x30] sm:$0xf]
    %v1741 = vld [vmem:[#allocation13 + $0x34] sm:$0xf]
    %v1742 = vld [vmem:[#allocation13 + $0x38] sm:$0xf]
    %v1743 = vld [vmem:[#allocation13 + $0x3c] sm:$0xf]
    %v1744 = vld [vmem:[#allocation13 + $0x40] sm:$0xf]
    %v1745 = vld [vmem:[#allocation13 + $0x44] sm:$0xf]
    %v1746 = vld [vmem:[#allocation13 + $0x48] sm:$0xf]
    %v1747 = vld [vmem:[#allocation13 + $0x4c] sm:$0xf]
    %v1748 = vld [vmem:[#allocation13 + $0x50] sm:$0xf]
    %v1749 = vld [vmem:[#allocation13 + $0x54] sm:$0xf]
    %v1750 = vld [vmem:[#allocation13 + $0x58] sm:$0xf]
    %v1751 = vld [vmem:[#allocation13 + $0x5c] sm:$0xf]
    %v1752 = vld [vmem:[#allocation13 + $0x60] sm:$0xf]
    %v1753 = vld [vmem:[#allocation13 + $0x64] sm:$0xf]
    %v1754 = vld [vmem:[#allocation13 + $0x68] sm:$0xf]
    %v1755 = vld [vmem:[#allocation13 + $0x6c] sm:$0xf]
    %v1756 = vld [vmem:[#allocation13 + $0x70] sm:$0xf]
    %v1757 = vld [vmem:[#allocation13 + $0x74] sm:$0xf]
    %v1758 = vld [vmem:[#allocation13 + $0x78] sm:$0xf]
    %v1759 = vld [vmem:[#allocation13 + $0x7c] sm:$0xf]
    %v1760 = vld [vmem:[%s10] sm:$0x1]
    %v1762 = vperm.slane %v1760, 0
    %v1796 = vunpack.c.l.b16 %v1728
    %v1797 = vunpack.c.l.b16 %v1729
    %v1798 = vunpack.c.l.b16 %v1730
    %v1799 = vunpack.c.l.b16 %v1731
    %v1800 = vunpack.c.l.b16 %v1732
    %v1801 = vunpack.c.l.b16 %v1733
    %v1802 = vunpack.c.l.b16 %v1734
    %v1803 = vunpack.c.l.b16 %v1735
    %v1804 = vunpack.c.l.b16 %v1736
    %v1805 = vunpack.c.l.b16 %v1737
    %v1806 = vunpack.c.l.b16 %v1738
    %v1807 = vunpack.c.l.b16 %v1739
    %v1808 = vunpack.c.l.b16 %v1740
    %v1809 = vunpack.c.l.b16 %v1741
    %v1810 = vunpack.c.l.b16 %v1742
    %v1811 = vunpack.c.l.b16 %v1743
    %v1812 = vunpack.c.l.b16 %v1744
    %v1813 = vunpack.c.l.b16 %v1745
    %v1814 = vunpack.c.l.b16 %v1746
    %v1815 = vunpack.c.l.b16 %v1747
    %v1816 = vunpack.c.l.b16 %v1748
    %v1817 = vunpack.c.l.b16 %v1749
    %v1818 = vunpack.c.l.b16 %v1750
    %v1819 = vunpack.c.l.b16 %v1751
    %v1820 = vunpack.c.l.b16 %v1752
    %v1821 = vunpack.c.l.b16 %v1753
    %v1822 = vunpack.c.l.b16 %v1754
    %v1823 = vunpack.c.l.b16 %v1755
    %v1824 = vunpack.c.l.b16 %v1756
    %v1825 = vunpack.c.l.b16 %v1757
    %v1826 = vunpack.c.l.b16 %v1758
    %v1827 = vunpack.c.l.b16 %v1759
    %v1828 = vpack.c.b16 %v1797, %v1796
    %v1829 = vpack.c.b16 %v1799, %v1798
    %v1830 = vpack.c.b16 %v1801, %v1800
    %v1831 = vpack.c.b16 %v1803, %v1802
    %v1832 = vpack.c.b16 %v1805, %v1804
    %v1833 = vpack.c.b16 %v1807, %v1806
    %v1834 = vpack.c.b16 %v1809, %v1808
    %v1835 = vpack.c.b16 %v1811, %v1810
    %v1836 = vpack.c.b16 %v1813, %v1812
    %v1837 = vpack.c.b16 %v1815, %v1814
    %v1838 = vpack.c.b16 %v1817, %v1816
    %v1839 = vpack.c.b16 %v1819, %v1818
    %v1840 = vpack.c.b16 %v1821, %v1820
    %v1841 = vpack.c.b16 %v1823, %v1822
    %v1842 = vpack.c.b16 %v1825, %v1824
    %v1843 = vpack.c.b16 %v1827, %v1826
    %1860 = vmatpush.bf16.msra.mxu0 %v1835
    %1861 = vmatpush.bf16.msra.mxu0 %v1834
    %1862 = vmatpush.bf16.msra.mxu0 %v1833
    %1863 = vmatpush.bf16.msra.mxu0 %v1832
    %1864 = vmatpush.bf16.msra.mxu0 %v1831
    %1865 = vmatpush.bf16.msra.mxu0 %v1830
    %1866 = vmatpush.bf16.msra.mxu0 %v1829
    %1867 = vmatpush.bf16.msra.mxu0 %v1828
    %1868 = vmatmul.bf16.gmra.mxu0 %v1726
    %v1869 = vpop.f32.mrf.mxu0
    %v1870 = vadd.f32 %v1762, %v1869
    %v1871 = vpop.f32.mrf.mxu0
    %1872 = vdwg.mxu0
    %1873 = vmatpush.bf16.msra.mxu0 %v1843
    %1874 = vmatpush.bf16.msra.mxu0 %v1842
    %1875 = vmatpush.bf16.msra.mxu0 %v1841
    %1876 = vmatpush.bf16.msra.mxu0 %v1840
    %1877 = vmatpush.bf16.msra.mxu0 %v1839
    %1878 = vmatpush.bf16.msra.mxu0 %v1838
    %1879 = vmatpush.bf16.msra.mxu0 %v1837
    %1880 = vmatpush.bf16.msra.mxu0 %v1836
    %1881 = vmatmul.bf16.gmra.mxu0 %v1727
    %v1882 = vpop.f32.mrf.mxu0
    %v1883 = vadd.f32 %v1870, %v1882
    %v1884 = vpop.f32.mrf.mxu0
    %1885 = vdwg.mxu0
    %1886 = vst [vmem:[#allocation14] sm:$0xff] %v1883
    // Predicated region
    $region74: #{tpu_custom_call.1} parent=1 // pred_check
      _
    $region75: #{tpu_custom_call.1} parent=1 // pred_check_branch
      %1888 = sbr.rel (0) target = $region77
    $region76: #{tpu_custom_call.1} parent=1 // pred_region
      %1890 = vsyncadd [#allocation4], 0
      %s1892 = sshll.u32 [#allocation14], 4
      %s1893 = int_to_ptr.vmem [resolvable:$true] %s1892
      %s1894 = sshll.u32 %s11, 4
      %s1895 = int_to_ptr.hbm [resolvable:$true] %s1894
      %1897 = dma.vmem_to_hbm [thread:$0]  %s1893, 128, %s1895, [#allocation4]
    $region77: #{tpu_custom_call.1} parent=1 // pred_fallthru
      _
    // Predicated region
    $region78: #{tpu_custom_call.1} parent=1 // pred_check
      _
    $region79: #{tpu_custom_call.1} parent=1 // pred_check_branch
      %1899 = sbr.rel (0) target = $region81
    $region80: #{tpu_custom_call.1} parent=1 // pred_region
      %1901 = dma.done [#allocation4], 128
    $region81: #{tpu_custom_call.1} parent=1 // pred_fallthru
      _
    %1902 = vsyncpa [#allocation3], 1
    %1903 = vsyncpa [#allocation6], 1
    %1904 = vsyncpa [#allocation9], 1
    %1905 = vsyncpa [#allocation12], 1
    %1906 = vsyncpa [#allocation4], 1

</llo_original>
